<compile_context>
chip_gen: v5e
topology: v5e:2x2
jax: 0.10.0
libtpu: 0.0.40
codegen_flags: <defaults>
</compile_context>

<pallas_src>
import jax
import jax.numpy as jnp
from jax.experimental import pallas as pl
from jax.experimental.pallas import tpu as pltpu

I_SIZE = 100   # LSTM input_size == Conv1d in_channels (as declared in __init__)
HID = 5        # LSTM hidden_size
C_OUT = 50     # Conv1d out_channels
KERN = 3       # Conv1d kernel_size
STRIDE = 2     # Conv1d stride
POOL_K = 3     # MaxPool1d kernel_size (stride=1, explicit in the module)


def _make_fused_kernel(L, N):
    L_conv = (L - KERN) // STRIDE + 1          # stride-2 conv positions
    L_pool = L_conv - (POOL_K - 1)             # maxpool(k=3, stride=1) positions
    L_full = L - KERN + 1                      # stride-1 conv positions (gather-free superset)

    def kernel(x_ref, wih_ref, whh_ref, b_ref, wc_ref, bc_ref, out_ref,
               gx_ref, hs_ref):
        # ---- Phase 1: hoisted input projection — ONE matmul over all L timesteps ----
        gx_ref[...] = (jnp.dot(x_ref[...], wih_ref[...],
                               preferred_element_type=jnp.float32) + b_ref[...])

        whh = whh_ref[...]                                 # (HID, 4*HID), gates (i,f,o,g)

        # ---- Phase 2: serial recurrence — 1 MXU push + 1 fused sigmoid per step ----
        h = jnp.zeros((N, HID), jnp.float32)
        c = jnp.zeros((N, HID), jnp.float32)
        for t in range(L):                                 # fully unrolled (L small)
            gx_t = gx_ref[pl.ds(t * N, N), :]              # (N, 4H) pre-activation
            if t == 0:
                pre = gx_t                                 # h == 0: skip recurrent matmul
            else:
                pre = gx_t + jnp.dot(h, whh, preferred_element_type=jnp.float32)
            sig = jax.nn.sigmoid(pre[:, :3 * HID])         # i | f | o in one EUP pass
            g_g = jnp.tanh(pre[:, 3 * HID:4 * HID])
            i_g = sig[:, 0:HID]
            f_g = sig[:, HID:2 * HID]
            o_g = sig[:, 2 * HID:3 * HID]
            c = i_g * g_g if t == 0 else f_g * c + i_g * g_g
            h = o_g * jnp.tanh(c)
            hs_ref[pl.ds(t * N, N), :] = jnp.maximum(h, 0.0)   # fused ReLU (layer_1)

        # ---- Phase 3: Conv1d(5->50, k=3, s=2) + ReLU + MaxPool1d(3, stride=1) ----
        # Single im2col contraction over stride-1 positions (each tap is a CONTIGUOUS
        # row slice of the scratch: tap k covers rows k*N .. (k+L_full)*N-1).
        a = jnp.concatenate(
            [hs_ref[pl.ds(k * N, L_full * N), :] for k in range(KERN)], axis=1)   # (L_full*N, K*H)
        conv_full = jnp.maximum(
            jnp.dot(a, wc_ref[...], preferred_element_type=jnp.float32) + bc_ref[...],
            0.0)                                            # (L_full*N, C_OUT)

        # Stride-2 selection fused into the maxpool: pooled[j] = max over conv
        # positions STRIDE*(j+w), w = 0..POOL_K-1 (all static row slices).
        rows = []
        for j in range(L_pool):
            m = conv_full[STRIDE * j * N:STRIDE * j * N + N, :]
            for w in range(1, POOL_K):
                base = STRIDE * (j + w) * N
                m = jnp.maximum(m, conv_full[base:base + N, :])
            rows.append(m)
        out_ref[...] = jnp.concatenate(rows, axis=0)        # (L_pool*N, C_OUT), lane-dense

    return kernel, L_conv, L_pool


def cnn_lstm_forward(x, params):
    L, N, I = x.shape
    assert I == I_SIZE
    kernel, L_conv, L_pool = _make_fused_kernel(L, N)

    # Fused 2D LSTM weight layouts; reorder PyTorch gates (i,f,g,o) -> (i,f,o,g)
    # so the sigmoid gates are lane-contiguous.
    order = jnp.array([0, 1, 3, 2])
    wih_f = jnp.transpose(params["w_ih"].reshape(4, HID, I_SIZE)[order], (2, 0, 1)
                          ).reshape(I_SIZE, 4 * HID).astype(jnp.float32)            # (I, 4H)
    whh_f = jnp.transpose(params["w_hh"].reshape(4, HID, HID)[order], (2, 0, 1)
                          ).reshape(HID, 4 * HID).astype(jnp.float32)                # (H, 4H)
    b_f = (params["b_ih"] + params["b_hh"]).reshape(4, HID)[order].reshape(
        1, 4 * HID).astype(jnp.float32)                                              # (1, 4H)

    # Conv weight as a single (K*H, C_OUT) im2col weight; only the first HID input
    # channels can be non-zero, so slicing is exactly equivalent to the zero pad.
    wc_f = jnp.transpose(params["conv_w"][:, :HID, :], (2, 1, 0)
                         ).reshape(KERN * HID, C_OUT).astype(jnp.float32)            # (K*H, Co)
    bc = params["conv_b"].reshape(1, C_OUT).astype(jnp.float32)

    x2d = x.reshape(L * N, I_SIZE).astype(jnp.float32)

    out2d = pl.pallas_call(
        kernel,
        out_shape=jax.ShapeDtypeStruct((L_pool * N, C_OUT), jnp.float32),
        grid_spec=pltpu.PrefetchScalarGridSpec(
            num_scalar_prefetch=0,
            grid=(1,),                                       # whole model: one grid point, one TC
            in_specs=[
                pl.BlockSpec((L * N, I_SIZE), lambda i: (0, 0)),
                pl.BlockSpec((I_SIZE, 4 * HID), lambda i: (0, 0)),
                pl.BlockSpec((HID, 4 * HID), lambda i: (0, 0)),
                pl.BlockSpec((1, 4 * HID), lambda i: (0, 0)),
                pl.BlockSpec((KERN * HID, C_OUT), lambda i: (0, 0)),
                pl.BlockSpec((1, C_OUT), lambda i: (0, 0)),
            ],
            out_specs=pl.BlockSpec((L_pool * N, C_OUT), lambda i: (0, 0)),
            scratch_shapes=[
                pltpu.VMEM((L * N, 4 * HID), jnp.float32),   # hoisted gate pre-activations
                pltpu.VMEM((L * N, HID), jnp.float32),       # ReLU(h_t) hidden sequence
            ],
        ),
        compiler_params=pltpu.CompilerParams(dimension_semantics=("arbitrary",)),
    )(x2d, wih_f, whh_f, b_f, wc_f, bc)

    # (L_pool*N, Co) -> PyTorch NCW (N, Co, L_pool); tiny reshape/transpose on 500 floats.
    return jnp.transpose(out2d.reshape(L_pool, N, C_OUT), (1, 2, 0))


# ----------------------------- pure-JAX reference -----------------------------
def _reference(x, params):
    L, N, _ = x.shape
    w_ih, w_hh = params["w_ih"], params["w_hh"]
    b = params["b_ih"] + params["b_hh"]
    h = jnp.zeros((N, HID), jnp.float32)
    c = jnp.zeros((N, HID), jnp.float32)
    ys = []
    for t in range(L):
        g = x[t] @ w_ih.T + h @ w_hh.T + b
        i = jax.nn.sigmoid(g[:, 0:HID])
        f = jax.nn.sigmoid(g[:, HID:2 * HID])
        gg = jnp.tanh(g[:, 2 * HID:3 * HID])
        o = jax.nn.sigmoid(g[:, 3 * HID:4 * HID])
        c = f * c + i * gg
        h = o * jnp.tanh(c)
        ys.append(jnp.maximum(h, 0.0))
    y = jnp.stack(ys, axis=0)                                # (L, N, H)
    y_ncw = jnp.transpose(y, (1, 2, 0))                      # (N, H, L)
    y_ncw = jnp.pad(y_ncw, ((0, 0), (0, I_SIZE - HID), (0, 0)))   # (N, 100, L)
    L_conv = (L - KERN) // STRIDE + 1
    L_pool = L_conv - (POOL_K - 1)
    cols = []
    for p in range(L_conv):
        win = y_ncw[:, :, STRIDE * p:STRIDE * p + KERN]      # (N, 100, K)
        cols.append(jnp.einsum("nck,ock->no", win, params["conv_w"]) + params["conv_b"][None, :])
    conv = jnp.maximum(jnp.stack(cols, axis=-1), 0.0)        # (N, Co, L_conv)
    pooled = conv[..., 0:L_pool]
    for k in range(1, POOL_K):
        pooled = jnp.maximum(pooled, conv[..., k:k + L_pool])
    return pooled


if __name__ == "__main__":
    L, N = 16, 2
    key = jax.random.PRNGKey(0)
    ks = jax.random.split(key, 7)

    x = jax.random.normal(ks[0], (L, N, I_SIZE), jnp.float32)

    s_l = 1.0 / float(jnp.sqrt(jnp.float32(HID)))
    s_c = 1.0 / float(jnp.sqrt(jnp.float32(I_SIZE * KERN)))
    params = {
        "w_ih": jax.random.uniform(ks[1], (4 * HID, I_SIZE), jnp.float32, -s_l, s_l),
        "w_hh": jax.random.uniform(ks[2], (4 * HID, HID), jnp.float32, -s_l, s_l),
        "b_ih": jax.random.uniform(ks[3], (4 * HID,), jnp.float32, -s_l, s_l),
        "b_hh": jax.random.uniform(ks[4], (4 * HID,), jnp.float32, -s_l, s_l),
        "conv_w": jax.random.uniform(ks[5], (C_OUT, I_SIZE, KERN), jnp.float32, -s_c, s_c),
        "conv_b": jax.random.uniform(ks[6], (C_OUT,), jnp.float32, -s_c, s_c),
    }

    out = jax.block_until_ready(cnn_lstm_forward(x, params))
    L_conv = (L - KERN) // STRIDE + 1
    L_pool = L_conv - (POOL_K - 1)
    assert out.shape == (N, C_OUT, L_pool), out.shape
    assert bool(jnp.all(jnp.isfinite(out)))

    ref = jax.block_until_ready(_reference(x, params))
    assert bool(jnp.allclose(out, ref, atol=2e-2, rtol=2e-2)), float(jnp.max(jnp.abs(out - ref)))

    print("KERNEL_OK")
</pallas_src>

<mosaic_0001>
module attributes {stable_mosaic.version = 11 : i64} {
  func.func @kernel(%arg0: i32, %arg1: memref<32x100xf32, #tpu.memory_space<vmem>>, %arg2: memref<100x20xf32, #tpu.memory_space<vmem>>, %arg3: memref<5x20xf32, #tpu.memory_space<vmem>>, %arg4: memref<1x20xf32, #tpu.memory_space<vmem>>, %arg5: memref<15x50xf32, #tpu.memory_space<vmem>>, %arg6: memref<1x50xf32, #tpu.memory_space<vmem>>, %arg7: memref<10x50xf32, #tpu.memory_space<vmem>>, %arg8: memref<32x20xf32, #tpu.memory_space<vmem>>, %arg9: memref<32x5xf32, #tpu.memory_space<vmem>>) attributes {dimension_semantics = [#tpu.dimension_semantics<arbitrary>], iteration_bounds = array<i64: 1>, scalar_prefetch = 0 : i64, scratch_operands = 2 : i64, tpu.core_type = #tpu.core_type<tc>, window_params = [{pipeline_mode = #tpu.pipeline_mode<synchronous>, transform_indices = @transform_0, window_bounds = array<i64: 32, 100>}, {pipeline_mode = #tpu.pipeline_mode<synchronous>, transform_indices = @transform_1, window_bounds = array<i64: 100, 20>}, {pipeline_mode = #tpu.pipeline_mode<synchronous>, transform_indices = @transform_2, window_bounds = array<i64: 5, 20>}, {pipeline_mode = #tpu.pipeline_mode<synchronous>, transform_indices = @transform_3, window_bounds = array<i64: 1, 20>}, {pipeline_mode = #tpu.pipeline_mode<synchronous>, transform_indices = @transform_4, window_bounds = array<i64: 15, 50>}, {pipeline_mode = #tpu.pipeline_mode<synchronous>, transform_indices = @transform_5, window_bounds = array<i64: 1, 50>}, {pipeline_mode = #tpu.pipeline_mode<synchronous>, transform_indices = @transform_6, window_bounds = array<i64: 10, 50>}]} {
    %c0 = arith.constant 0 : index
    %c0_0 = arith.constant 0 : index
    %0 = vector.load %arg1[%c0, %c0_0] : memref<32x100xf32, #tpu.memory_space<vmem>>, vector<32x100xf32>
    %c0_1 = arith.constant 0 : index
    %c0_2 = arith.constant 0 : index
    %1 = vector.load %arg2[%c0_1, %c0_2] : memref<100x20xf32, #tpu.memory_space<vmem>>, vector<100x20xf32>
    %cst = arith.constant dense<0.000000e+00> : vector<32x20xf32>
    %2 = tpu.matmul %0, %1, %cst {dimension_numbers = #tpu.dot_dimension_numbers<[1], [0], [0], [1], [0, 0, 1, 1], [], []>} : vector<32x100xf32>, vector<100x20xf32>, vector<32x20xf32> -> vector<32x20xf32>
    %c0_3 = arith.constant 0 : index
    %c0_4 = arith.constant 0 : index
    %3 = vector.load %arg4[%c0_3, %c0_4] : memref<1x20xf32, #tpu.memory_space<vmem>>, vector<1x20xf32>
    %4 = vector.broadcast %3 : vector<1x20xf32> to vector<32x20xf32>
    %5 = arith.addf %2, %4 : vector<32x20xf32>
    %c0_5 = arith.constant 0 : index
    %c0_6 = arith.constant 0 : index
    %6 = vector.load %arg8[%c0_5, %c0_6] : memref<32x20xf32, #tpu.memory_space<vmem>>, vector<32x20xf32>
    tpu.vector_store %arg8[%c0_5, %c0_6], %5 {strides = array<i32>} : memref<32x20xf32, #tpu.memory_space<vmem>>, vector<32x20xf32>,
    %c0_7 = arith.constant 0 : index
    %c0_8 = arith.constant 0 : index
    %7 = vector.load %arg3[%c0_7, %c0_8] : memref<5x20xf32, #tpu.memory_space<vmem>>, vector<5x20xf32>
    %c0_9 = arith.constant 0 : index
    %c0_10 = arith.constant 0 : index
    %8 = vector.load %arg8[%c0_9, %c0_10] : memref<32x20xf32, #tpu.memory_space<vmem>>, vector<2x20xf32>
    %9 = vector.extract_strided_slice %8 {offsets = [0, 0], sizes = [2, 15], strides = [1, 1]} : vector<2x20xf32> to vector<2x15xf32>
    %10 = arith.negf %9 : vector<2x15xf32>
    %11 = math.exp %10 : vector<2x15xf32>
    %cst_11 = arith.constant 1.000000e+00 : f32
    %12 = vector.broadcast %cst_11 : f32 to vector<2x15xf32>
    %13 = arith.addf %12, %11 : vector<2x15xf32>
    %14 = arith.divf %12, %13 : vector<2x15xf32>
    %15 = vector.extract_strided_slice %8 {offsets = [0, 15], sizes = [2, 5], strides = [1, 1]} : vector<2x20xf32> to vector<2x5xf32>
    %16 = math.tanh %15 : vector<2x5xf32>
    %17 = vector.extract_strided_slice %14 {offsets = [0, 0], sizes = [2, 5], strides = [1, 1]} : vector<2x15xf32> to vector<2x5xf32>
    %18 = vector.extract_strided_slice %14 {offsets = [0, 10], sizes = [2, 5], strides = [1, 1]} : vector<2x15xf32> to vector<2x5xf32>
    %19 = arith.mulf %17, %16 : vector<2x5xf32>
    %20 = math.tanh %19 : vector<2x5xf32>
    %21 = arith.mulf %18, %20 : vector<2x5xf32>
    %cst_12 = arith.constant 0.000000e+00 : f32
    %22 = vector.broadcast %cst_12 : f32 to vector<2x5xf32>
    %23 = arith.maximumf %21, %22 : vector<2x5xf32>
    %c0_13 = arith.constant 0 : index
    %c0_14 = arith.constant 0 : index
    %24 = vector.load %arg9[%c0_13, %c0_14] : memref<32x5xf32, #tpu.memory_space<vmem>>, vector<2x5xf32>
    tpu.vector_store %arg9[%c0_13, %c0_14], %23 {strides = array<i32>} : memref<32x5xf32, #tpu.memory_space<vmem>>, vector<2x5xf32>,
    %c2 = arith.constant 2 : index
    %c0_15 = arith.constant 0 : index
    %25 = vector.load %arg8[%c2, %c0_15] : memref<32x20xf32, #tpu.memory_space<vmem>>, vector<2x20xf32>
    %cst_16 = arith.constant dense<0.000000e+00> : vector<2x20xf32>
    %26 = tpu.matmul %21, %7, %cst_16 {dimension_numbers = #tpu.dot_dimension_numbers<[1], [0], [0], [1], [0, 0, 1, 1], [], []>} : vector<2x5xf32>, vector<5x20xf32>, vector<2x20xf32> -> vector<2x20xf32>
    %27 = arith.addf %25, %26 : vector<2x20xf32>
    %28 = vector.extract_strided_slice %27 {offsets = [0, 0], sizes = [2, 15], strides = [1, 1]} : vector<2x20xf32> to vector<2x15xf32>
    %29 = arith.negf %28 : vector<2x15xf32>
    %30 = math.exp %29 : vector<2x15xf32>
    %cst_17 = arith.constant 1.000000e+00 : f32
    %31 = vector.broadcast %cst_17 : f32 to vector<2x15xf32>
    %32 = arith.addf %31, %30 : vector<2x15xf32>
    %33 = arith.divf %31, %32 : vector<2x15xf32>
    %34 = vector.extract_strided_slice %27 {offsets = [0, 15], sizes = [2, 5], strides = [1, 1]} : vector<2x20xf32> to vector<2x5xf32>
    %35 = math.tanh %34 : vector<2x5xf32>
    %36 = vector.extract_strided_slice %33 {offsets = [0, 0], sizes = [2, 5], strides = [1, 1]} : vector<2x15xf32> to vector<2x5xf32>
    %37 = vector.extract_strided_slice %33 {offsets = [0, 5], sizes = [2, 5], strides = [1, 1]} : vector<2x15xf32> to vector<2x5xf32>
    %38 = vector.extract_strided_slice %33 {offsets = [0, 10], sizes = [2, 5], strides = [1, 1]} : vector<2x15xf32> to vector<2x5xf32>
    %39 = arith.mulf %37, %19 : vector<2x5xf32>
    %40 = arith.mulf %36, %35 : vector<2x5xf32>
    %41 = arith.addf %39, %40 : vector<2x5xf32>
    %42 = math.tanh %41 : vector<2x5xf32>
    %43 = arith.mulf %38, %42 : vector<2x5xf32>
    %cst_18 = arith.constant 0.000000e+00 : f32
    %44 = vector.broadcast %cst_18 : f32 to vector<2x5xf32>
    %45 = arith.maximumf %43, %44 : vector<2x5xf32>
    %c2_19 = arith.constant 2 : index
    %c0_20 = arith.constant 0 : index
    %46 = vector.load %arg9[%c2_19, %c0_20] : memref<32x5xf32, #tpu.memory_space<vmem>>, vector<2x5xf32>
    tpu.vector_store %arg9[%c2_19, %c0_20], %45 {strides = array<i32>} : memref<32x5xf32, #tpu.memory_space<vmem>>, vector<2x5xf32>,
    %c4 = arith.constant 4 : index
    %c0_21 = arith.constant 0 : index
    %47 = vector.load %arg8[%c4, %c0_21] : memref<32x20xf32, #tpu.memory_space<vmem>>, vector<2x20xf32>
    %cst_22 = arith.constant dense<0.000000e+00> : vector<2x20xf32>
    %48 = tpu.matmul %43, %7, %cst_22 {dimension_numbers = #tpu.dot_dimension_numbers<[1], [0], [0], [1], [0, 0, 1, 1], [], []>} : vector<2x5xf32>, vector<5x20xf32>, vector<2x20xf32> -> vector<2x20xf32>
    %49 = arith.addf %47, %48 : vector<2x20xf32>
    %50 = vector.extract_strided_slice %49 {offsets = [0, 0], sizes = [2, 15], strides = [1, 1]} : vector<2x20xf32> to vector<2x15xf32>
    %51 = arith.negf %50 : vector<2x15xf32>
    %52 = math.exp %51 : vector<2x15xf32>
    %cst_23 = arith.constant 1.000000e+00 : f32
    %53 = vector.broadcast %cst_23 : f32 to vector<2x15xf32>
    %54 = arith.addf %53, %52 : vector<2x15xf32>
    %55 = arith.divf %53, %54 : vector<2x15xf32>
    %56 = vector.extract_strided_slice %49 {offsets = [0, 15], sizes = [2, 5], strides = [1, 1]} : vector<2x20xf32> to vector<2x5xf32>
    %57 = math.tanh %56 : vector<2x5xf32>
    %58 = vector.extract_strided_slice %55 {offsets = [0, 0], sizes = [2, 5], strides = [1, 1]} : vector<2x15xf32> to vector<2x5xf32>
    %59 = vector.extract_strided_slice %55 {offsets = [0, 5], sizes = [2, 5], strides = [1, 1]} : vector<2x15xf32> to vector<2x5xf32>
    %60 = vector.extract_strided_slice %55 {offsets = [0, 10], sizes = [2, 5], strides = [1, 1]} : vector<2x15xf32> to vector<2x5xf32>
    %61 = arith.mulf %59, %41 : vector<2x5xf32>
    %62 = arith.mulf %58, %57 : vector<2x5xf32>
    %63 = arith.addf %61, %62 : vector<2x5xf32>
    %64 = math.tanh %63 : vector<2x5xf32>
    %65 = arith.mulf %60, %64 : vector<2x5xf32>
    %cst_24 = arith.constant 0.000000e+00 : f32
    %66 = vector.broadcast %cst_24 : f32 to vector<2x5xf32>
    %67 = arith.maximumf %65, %66 : vector<2x5xf32>
    %c4_25 = arith.constant 4 : index
    %c0_26 = arith.constant 0 : index
    %68 = vector.load %arg9[%c4_25, %c0_26] : memref<32x5xf32, #tpu.memory_space<vmem>>, vector<2x5xf32>
    tpu.vector_store %arg9[%c4_25, %c0_26], %67 {strides = array<i32>} : memref<32x5xf32, #tpu.memory_space<vmem>>, vector<2x5xf32>,
    %c6 = arith.constant 6 : index
    %c0_27 = arith.constant 0 : index
    %69 = vector.load %arg8[%c6, %c0_27] : memref<32x20xf32, #tpu.memory_space<vmem>>, vector<2x20xf32>
    %cst_28 = arith.constant dense<0.000000e+00> : vector<2x20xf32>
    %70 = tpu.matmul %65, %7, %cst_28 {dimension_numbers = #tpu.dot_dimension_numbers<[1], [0], [0], [1], [0, 0, 1, 1], [], []>} : vector<2x5xf32>, vector<5x20xf32>, vector<2x20xf32> -> vector<2x20xf32>
    %71 = arith.addf %69, %70 : vector<2x20xf32>
    %72 = vector.extract_strided_slice %71 {offsets = [0, 0], sizes = [2, 15], strides = [1, 1]} : vector<2x20xf32> to vector<2x15xf32>
    %73 = arith.negf %72 : vector<2x15xf32>
    %74 = math.exp %73 : vector<2x15xf32>
    %cst_29 = arith.constant 1.000000e+00 : f32
    %75 = vector.broadcast %cst_29 : f32 to vector<2x15xf32>
    %76 = arith.addf %75, %74 : vector<2x15xf32>
    %77 = arith.divf %75, %76 : vector<2x15xf32>
    %78 = vector.extract_strided_slice %71 {offsets = [0, 15], sizes = [2, 5], strides = [1, 1]} : vector<2x20xf32> to vector<2x5xf32>
    %79 = math.tanh %78 : vector<2x5xf32>
    %80 = vector.extract_strided_slice %77 {offsets = [0, 0], sizes = [2, 5], strides = [1, 1]} : vector<2x15xf32> to vector<2x5xf32>
    %81 = vector.extract_strided_slice %77 {offsets = [0, 5], sizes = [2, 5], strides = [1, 1]} : vector<2x15xf32> to vector<2x5xf32>
    %82 = vector.extract_strided_slice %77 {offsets = [0, 10], sizes = [2, 5], strides = [1, 1]} : vector<2x15xf32> to vector<2x5xf32>
    %83 = arith.mulf %81, %63 : vector<2x5xf32>
    %84 = arith.mulf %80, %79 : vector<2x5xf32>
    %85 = arith.addf %83, %84 : vector<2x5xf32>
    %86 = math.tanh %85 : vector<2x5xf32>
    %87 = arith.mulf %82, %86 : vector<2x5xf32>
    %cst_30 = arith.constant 0.000000e+00 : f32
    %88 = vector.broadcast %cst_30 : f32 to vector<2x5xf32>
    %89 = arith.maximumf %87, %88 : vector<2x5xf32>
    %c6_31 = arith.constant 6 : index
    %c0_32 = arith.constant 0 : index
    %90 = vector.load %arg9[%c6_31, %c0_32] : memref<32x5xf32, #tpu.memory_space<vmem>>, vector<2x5xf32>
    tpu.vector_store %arg9[%c6_31, %c0_32], %89 {strides = array<i32>} : memref<32x5xf32, #tpu.memory_space<vmem>>, vector<2x5xf32>,
    %c8 = arith.constant 8 : index
    %c0_33 = arith.constant 0 : index
    %91 = vector.load %arg8[%c8, %c0_33] : memref<32x20xf32, #tpu.memory_space<vmem>>, vector<2x20xf32>
    %cst_34 = arith.constant dense<0.000000e+00> : vector<2x20xf32>
    %92 = tpu.matmul %87, %7, %cst_34 {dimension_numbers = #tpu.dot_dimension_numbers<[1], [0], [0], [1], [0, 0, 1, 1], [], []>} : vector<2x5xf32>, vector<5x20xf32>, vector<2x20xf32> -> vector<2x20xf32>
    %93 = arith.addf %91, %92 : vector<2x20xf32>
    %94 = vector.extract_strided_slice %93 {offsets = [0, 0], sizes = [2, 15], strides = [1, 1]} : vector<2x20xf32> to vector<2x15xf32>
    %95 = arith.negf %94 : vector<2x15xf32>
    %96 = math.exp %95 : vector<2x15xf32>
    %cst_35 = arith.constant 1.000000e+00 : f32
    %97 = vector.broadcast %cst_35 : f32 to vector<2x15xf32>
    %98 = arith.addf %97, %96 : vector<2x15xf32>
    %99 = arith.divf %97, %98 : vector<2x15xf32>
    %100 = vector.extract_strided_slice %93 {offsets = [0, 15], sizes = [2, 5], strides = [1, 1]} : vector<2x20xf32> to vector<2x5xf32>
    %101 = math.tanh %100 : vector<2x5xf32>
    %102 = vector.extract_strided_slice %99 {offsets = [0, 0], sizes = [2, 5], strides = [1, 1]} : vector<2x15xf32> to vector<2x5xf32>
    %103 = vector.extract_strided_slice %99 {offsets = [0, 5], sizes = [2, 5], strides = [1, 1]} : vector<2x15xf32> to vector<2x5xf32>
    %104 = vector.extract_strided_slice %99 {offsets = [0, 10], sizes = [2, 5], strides = [1, 1]} : vector<2x15xf32> to vector<2x5xf32>
    %105 = arith.mulf %103, %85 : vector<2x5xf32>
    %106 = arith.mulf %102, %101 : vector<2x5xf32>
    %107 = arith.addf %105, %106 : vector<2x5xf32>
    %108 = math.tanh %107 : vector<2x5xf32>
    %109 = arith.mulf %104, %108 : vector<2x5xf32>
    %cst_36 = arith.constant 0.000000e+00 : f32
    %110 = vector.broadcast %cst_36 : f32 to vector<2x5xf32>
    %111 = arith.maximumf %109, %110 : vector<2x5xf32>
    %c8_37 = arith.constant 8 : index
    %c0_38 = arith.constant 0 : index
    %112 = vector.load %arg9[%c8_37, %c0_38] : memref<32x5xf32, #tpu.memory_space<vmem>>, vector<2x5xf32>
    tpu.vector_store %arg9[%c8_37, %c0_38], %111 {strides = array<i32>} : memref<32x5xf32, #tpu.memory_space<vmem>>, vector<2x5xf32>,
    %c10 = arith.constant 10 : index
    %c0_39 = arith.constant 0 : index
    %113 = vector.load %arg8[%c10, %c0_39] : memref<32x20xf32, #tpu.memory_space<vmem>>, vector<2x20xf32>
    %cst_40 = arith.constant dense<0.000000e+00> : vector<2x20xf32>
    %114 = tpu.matmul %109, %7, %cst_40 {dimension_numbers = #tpu.dot_dimension_numbers<[1], [0], [0], [1], [0, 0, 1, 1], [], []>} : vector<2x5xf32>, vector<5x20xf32>, vector<2x20xf32> -> vector<2x20xf32>
    %115 = arith.addf %113, %114 : vector<2x20xf32>
    %116 = vector.extract_strided_slice %115 {offsets = [0, 0], sizes = [2, 15], strides = [1, 1]} : vector<2x20xf32> to vector<2x15xf32>
    %117 = arith.negf %116 : vector<2x15xf32>
    %118 = math.exp %117 : vector<2x15xf32>
    %cst_41 = arith.constant 1.000000e+00 : f32
    %119 = vector.broadcast %cst_41 : f32 to vector<2x15xf32>
    %120 = arith.addf %119, %118 : vector<2x15xf32>
    %121 = arith.divf %119, %120 : vector<2x15xf32>
    %122 = vector.extract_strided_slice %115 {offsets = [0, 15], sizes = [2, 5], strides = [1, 1]} : vector<2x20xf32> to vector<2x5xf32>
    %123 = math.tanh %122 : vector<2x5xf32>
    %124 = vector.extract_strided_slice %121 {offsets = [0, 0], sizes = [2, 5], strides = [1, 1]} : vector<2x15xf32> to vector<2x5xf32>
    %125 = vector.extract_strided_slice %121 {offsets = [0, 5], sizes = [2, 5], strides = [1, 1]} : vector<2x15xf32> to vector<2x5xf32>
    %126 = vector.extract_strided_slice %121 {offsets = [0, 10], sizes = [2, 5], strides = [1, 1]} : vector<2x15xf32> to vector<2x5xf32>
    %127 = arith.mulf %125, %107 : vector<2x5xf32>
    %128 = arith.mulf %124, %123 : vector<2x5xf32>
    %129 = arith.addf %127, %128 : vector<2x5xf32>
    %130 = math.tanh %129 : vector<2x5xf32>
    %131 = arith.mulf %126, %130 : vector<2x5xf32>
    %cst_42 = arith.constant 0.000000e+00 : f32
    %132 = vector.broadcast %cst_42 : f32 to vector<2x5xf32>
    %133 = arith.maximumf %131, %132 : vector<2x5xf32>
    %c10_43 = arith.constant 10 : index
    %c0_44 = arith.constant 0 : index
    %134 = vector.load %arg9[%c10_43, %c0_44] : memref<32x5xf32, #tpu.memory_space<vmem>>, vector<2x5xf32>
    tpu.vector_store %arg9[%c10_43, %c0_44], %133 {strides = array<i32>} : memref<32x5xf32, #tpu.memory_space<vmem>>, vector<2x5xf32>,
    %c12 = arith.constant 12 : index
    %c0_45 = arith.constant 0 : index
    %135 = vector.load %arg8[%c12, %c0_45] : memref<32x20xf32, #tpu.memory_space<vmem>>, vector<2x20xf32>
    %cst_46 = arith.constant dense<0.000000e+00> : vector<2x20xf32>
    %136 = tpu.matmul %131, %7, %cst_46 {dimension_numbers = #tpu.dot_dimension_numbers<[1], [0], [0], [1], [0, 0, 1, 1], [], []>} : vector<2x5xf32>, vector<5x20xf32>, vector<2x20xf32> -> vector<2x20xf32>
    %137 = arith.addf %135, %136 : vector<2x20xf32>
    %138 = vector.extract_strided_slice %137 {offsets = [0, 0], sizes = [2, 15], strides = [1, 1]} : vector<2x20xf32> to vector<2x15xf32>
    %139 = arith.negf %138 : vector<2x15xf32>
    %140 = math.exp %139 : vector<2x15xf32>
    %cst_47 = arith.constant 1.000000e+00 : f32
    %141 = vector.broadcast %cst_47 : f32 to vector<2x15xf32>
    %142 = arith.addf %141, %140 : vector<2x15xf32>
    %143 = arith.divf %141, %142 : vector<2x15xf32>
    %144 = vector.extract_strided_slice %137 {offsets = [0, 15], sizes = [2, 5], strides = [1, 1]} : vector<2x20xf32> to vector<2x5xf32>
    %145 = math.tanh %144 : vector<2x5xf32>
    %146 = vector.extract_strided_slice %143 {offsets = [0, 0], sizes = [2, 5], strides = [1, 1]} : vector<2x15xf32> to vector<2x5xf32>
    %147 = vector.extract_strided_slice %143 {offsets = [0, 5], sizes = [2, 5], strides = [1, 1]} : vector<2x15xf32> to vector<2x5xf32>
    %148 = vector.extract_strided_slice %143 {offsets = [0, 10], sizes = [2, 5], strides = [1, 1]} : vector<2x15xf32> to vector<2x5xf32>
    %149 = arith.mulf %147, %129 : vector<2x5xf32>
    %150 = arith.mulf %146, %145 : vector<2x5xf32>
    %151 = arith.addf %149, %150 : vector<2x5xf32>
    %152 = math.tanh %151 : vector<2x5xf32>
    %153 = arith.mulf %148, %152 : vector<2x5xf32>
    %cst_48 = arith.constant 0.000000e+00 : f32
    %154 = vector.broadcast %cst_48 : f32 to vector<2x5xf32>
    %155 = arith.maximumf %153, %154 : vector<2x5xf32>
    %c12_49 = arith.constant 12 : index
    %c0_50 = arith.constant 0 : index
    %156 = vector.load %arg9[%c12_49, %c0_50] : memref<32x5xf32, #tpu.memory_space<vmem>>, vector<2x5xf32>
    tpu.vector_store %arg9[%c12_49, %c0_50], %155 {strides = array<i32>} : memref<32x5xf32, #tpu.memory_space<vmem>>, vector<2x5xf32>,
    %c14 = arith.constant 14 : index
    %c0_51 = arith.constant 0 : index
    %157 = vector.load %arg8[%c14, %c0_51] : memref<32x20xf32, #tpu.memory_space<vmem>>, vector<2x20xf32>
    %cst_52 = arith.constant dense<0.000000e+00> : vector<2x20xf32>
    %158 = tpu.matmul %153, %7, %cst_52 {dimension_numbers = #tpu.dot_dimension_numbers<[1], [0], [0], [1], [0, 0, 1, 1], [], []>} : vector<2x5xf32>, vector<5x20xf32>, vector<2x20xf32> -> vector<2x20xf32>
    %159 = arith.addf %157, %158 : vector<2x20xf32>
    %160 = vector.extract_strided_slice %159 {offsets = [0, 0], sizes = [2, 15], strides = [1, 1]} : vector<2x20xf32> to vector<2x15xf32>
    %161 = arith.negf %160 : vector<2x15xf32>
    %162 = math.exp %161 : vector<2x15xf32>
    %cst_53 = arith.constant 1.000000e+00 : f32
    %163 = vector.broadcast %cst_53 : f32 to vector<2x15xf32>
    %164 = arith.addf %163, %162 : vector<2x15xf32>
    %165 = arith.divf %163, %164 : vector<2x15xf32>
    %166 = vector.extract_strided_slice %159 {offsets = [0, 15], sizes = [2, 5], strides = [1, 1]} : vector<2x20xf32> to vector<2x5xf32>
    %167 = math.tanh %166 : vector<2x5xf32>
    %168 = vector.extract_strided_slice %165 {offsets = [0, 0], sizes = [2, 5], strides = [1, 1]} : vector<2x15xf32> to vector<2x5xf32>
    %169 = vector.extract_strided_slice %165 {offsets = [0, 5], sizes = [2, 5], strides = [1, 1]} : vector<2x15xf32> to vector<2x5xf32>
    %170 = vector.extract_strided_slice %165 {offsets = [0, 10], sizes = [2, 5], strides = [1, 1]} : vector<2x15xf32> to vector<2x5xf32>
    %171 = arith.mulf %169, %151 : vector<2x5xf32>
    %172 = arith.mulf %168, %167 : vector<2x5xf32>
    %173 = arith.addf %171, %172 : vector<2x5xf32>
    %174 = math.tanh %173 : vector<2x5xf32>
    %175 = arith.mulf %170, %174 : vector<2x5xf32>
    %cst_54 = arith.constant 0.000000e+00 : f32
    %176 = vector.broadcast %cst_54 : f32 to vector<2x5xf32>
    %177 = arith.maximumf %175, %176 : vector<2x5xf32>
    %c14_55 = arith.constant 14 : index
    %c0_56 = arith.constant 0 : index
    %178 = vector.load %arg9[%c14_55, %c0_56] : memref<32x5xf32, #tpu.memory_space<vmem>>, vector<2x5xf32>
    tpu.vector_store %arg9[%c14_55, %c0_56], %177 {strides = array<i32>} : memref<32x5xf32, #tpu.memory_space<vmem>>, vector<2x5xf32>,
    %c16 = arith.constant 16 : index
    %c0_57 = arith.constant 0 : index
    %179 = vector.load %arg8[%c16, %c0_57] : memref<32x20xf32, #tpu.memory_space<vmem>>, vector<2x20xf32>
    %cst_58 = arith.constant dense<0.000000e+00> : vector<2x20xf32>
    %180 = tpu.matmul %175, %7, %cst_58 {dimension_numbers = #tpu.dot_dimension_numbers<[1], [0], [0], [1], [0, 0, 1, 1], [], []>} : vector<2x5xf32>, vector<5x20xf32>, vector<2x20xf32> -> vector<2x20xf32>
    %181 = arith.addf %179, %180 : vector<2x20xf32>
    %182 = vector.extract_strided_slice %181 {offsets = [0, 0], sizes = [2, 15], strides = [1, 1]} : vector<2x20xf32> to vector<2x15xf32>
    %183 = arith.negf %182 : vector<2x15xf32>
    %184 = math.exp %183 : vector<2x15xf32>
    %cst_59 = arith.constant 1.000000e+00 : f32
    %185 = vector.broadcast %cst_59 : f32 to vector<2x15xf32>
    %186 = arith.addf %185, %184 : vector<2x15xf32>
    %187 = arith.divf %185, %186 : vector<2x15xf32>
    %188 = vector.extract_strided_slice %181 {offsets = [0, 15], sizes = [2, 5], strides = [1, 1]} : vector<2x20xf32> to vector<2x5xf32>
    %189 = math.tanh %188 : vector<2x5xf32>
    %190 = vector.extract_strided_slice %187 {offsets = [0, 0], sizes = [2, 5], strides = [1, 1]} : vector<2x15xf32> to vector<2x5xf32>
    %191 = vector.extract_strided_slice %187 {offsets = [0, 5], sizes = [2, 5], strides = [1, 1]} : vector<2x15xf32> to vector<2x5xf32>
    %192 = vector.extract_strided_slice %187 {offsets = [0, 10], sizes = [2, 5], strides = [1, 1]} : vector<2x15xf32> to vector<2x5xf32>
    %193 = arith.mulf %191, %173 : vector<2x5xf32>
    %194 = arith.mulf %190, %189 : vector<2x5xf32>
    %195 = arith.addf %193, %194 : vector<2x5xf32>
    %196 = math.tanh %195 : vector<2x5xf32>
    %197 = arith.mulf %192, %196 : vector<2x5xf32>
    %cst_60 = arith.constant 0.000000e+00 : f32
    %198 = vector.broadcast %cst_60 : f32 to vector<2x5xf32>
    %199 = arith.maximumf %197, %198 : vector<2x5xf32>
    %c16_61 = arith.constant 16 : index
    %c0_62 = arith.constant 0 : index
    %200 = vector.load %arg9[%c16_61, %c0_62] : memref<32x5xf32, #tpu.memory_space<vmem>>, vector<2x5xf32>
    tpu.vector_store %arg9[%c16_61, %c0_62], %199 {strides = array<i32>} : memref<32x5xf32, #tpu.memory_space<vmem>>, vector<2x5xf32>,
    %c18 = arith.constant 18 : index
    %c0_63 = arith.constant 0 : index
    %201 = vector.load %arg8[%c18, %c0_63] : memref<32x20xf32, #tpu.memory_space<vmem>>, vector<2x20xf32>
    %cst_64 = arith.constant dense<0.000000e+00> : vector<2x20xf32>
    %202 = tpu.matmul %197, %7, %cst_64 {dimension_numbers = #tpu.dot_dimension_numbers<[1], [0], [0], [1], [0, 0, 1, 1], [], []>} : vector<2x5xf32>, vector<5x20xf32>, vector<2x20xf32> -> vector<2x20xf32>
    %203 = arith.addf %201, %202 : vector<2x20xf32>
    %204 = vector.extract_strided_slice %203 {offsets = [0, 0], sizes = [2, 15], strides = [1, 1]} : vector<2x20xf32> to vector<2x15xf32>
    %205 = arith.negf %204 : vector<2x15xf32>
    %206 = math.exp %205 : vector<2x15xf32>
    %cst_65 = arith.constant 1.000000e+00 : f32
    %207 = vector.broadcast %cst_65 : f32 to vector<2x15xf32>
    %208 = arith.addf %207, %206 : vector<2x15xf32>
    %209 = arith.divf %207, %208 : vector<2x15xf32>
    %210 = vector.extract_strided_slice %203 {offsets = [0, 15], sizes = [2, 5], strides = [1, 1]} : vector<2x20xf32> to vector<2x5xf32>
    %211 = math.tanh %210 : vector<2x5xf32>
    %212 = vector.extract_strided_slice %209 {offsets = [0, 0], sizes = [2, 5], strides = [1, 1]} : vector<2x15xf32> to vector<2x5xf32>
    %213 = vector.extract_strided_slice %209 {offsets = [0, 5], sizes = [2, 5], strides = [1, 1]} : vector<2x15xf32> to vector<2x5xf32>
    %214 = vector.extract_strided_slice %209 {offsets = [0, 10], sizes = [2, 5], strides = [1, 1]} : vector<2x15xf32> to vector<2x5xf32>
    %215 = arith.mulf %213, %195 : vector<2x5xf32>
    %216 = arith.mulf %212, %211 : vector<2x5xf32>
    %217 = arith.addf %215, %216 : vector<2x5xf32>
    %218 = math.tanh %217 : vector<2x5xf32>
    %219 = arith.mulf %214, %218 : vector<2x5xf32>
    %cst_66 = arith.constant 0.000000e+00 : f32
    %220 = vector.broadcast %cst_66 : f32 to vector<2x5xf32>
    %221 = arith.maximumf %219, %220 : vector<2x5xf32>
    %c18_67 = arith.constant 18 : index
    %c0_68 = arith.constant 0 : index
    %222 = vector.load %arg9[%c18_67, %c0_68] : memref<32x5xf32, #tpu.memory_space<vmem>>, vector<2x5xf32>
    tpu.vector_store %arg9[%c18_67, %c0_68], %221 {strides = array<i32>} : memref<32x5xf32, #tpu.memory_space<vmem>>, vector<2x5xf32>,
    %c20 = arith.constant 20 : index
    %c0_69 = arith.constant 0 : index
    %223 = vector.load %arg8[%c20, %c0_69] : memref<32x20xf32, #tpu.memory_space<vmem>>, vector<2x20xf32>
    %cst_70 = arith.constant dense<0.000000e+00> : vector<2x20xf32>
    %224 = tpu.matmul %219, %7, %cst_70 {dimension_numbers = #tpu.dot_dimension_numbers<[1], [0], [0], [1], [0, 0, 1, 1], [], []>} : vector<2x5xf32>, vector<5x20xf32>, vector<2x20xf32> -> vector<2x20xf32>
    %225 = arith.addf %223, %224 : vector<2x20xf32>
    %226 = vector.extract_strided_slice %225 {offsets = [0, 0], sizes = [2, 15], strides = [1, 1]} : vector<2x20xf32> to vector<2x15xf32>
    %227 = arith.negf %226 : vector<2x15xf32>
    %228 = math.exp %227 : vector<2x15xf32>
    %cst_71 = arith.constant 1.000000e+00 : f32
    %229 = vector.broadcast %cst_71 : f32 to vector<2x15xf32>
    %230 = arith.addf %229, %228 : vector<2x15xf32>
    %231 = arith.divf %229, %230 : vector<2x15xf32>
    %232 = vector.extract_strided_slice %225 {offsets = [0, 15], sizes = [2, 5], strides = [1, 1]} : vector<2x20xf32> to vector<2x5xf32>
    %233 = math.tanh %232 : vector<2x5xf32>
    %234 = vector.extract_strided_slice %231 {offsets = [0, 0], sizes = [2, 5], strides = [1, 1]} : vector<2x15xf32> to vector<2x5xf32>
    %235 = vector.extract_strided_slice %231 {offsets = [0, 5], sizes = [2, 5], strides = [1, 1]} : vector<2x15xf32> to vector<2x5xf32>
    %236 = vector.extract_strided_slice %231 {offsets = [0, 10], sizes = [2, 5], strides = [1, 1]} : vector<2x15xf32> to vector<2x5xf32>
    %237 = arith.mulf %235, %217 : vector<2x5xf32>
    %238 = arith.mulf %234, %233 : vector<2x5xf32>
    %239 = arith.addf %237, %238 : vector<2x5xf32>
    %240 = math.tanh %239 : vector<2x5xf32>
    %241 = arith.mulf %236, %240 : vector<2x5xf32>
    %cst_72 = arith.constant 0.000000e+00 : f32
    %242 = vector.broadcast %cst_72 : f32 to vector<2x5xf32>
    %243 = arith.maximumf %241, %242 : vector<2x5xf32>
    %c20_73 = arith.constant 20 : index
    %c0_74 = arith.constant 0 : index
    %244 = vector.load %arg9[%c20_73, %c0_74] : memref<32x5xf32, #tpu.memory_space<vmem>>, vector<2x5xf32>
    tpu.vector_store %arg9[%c20_73, %c0_74], %243 {strides = array<i32>} : memref<32x5xf32, #tpu.memory_space<vmem>>, vector<2x5xf32>,
    %c22 = arith.constant 22 : index
    %c0_75 = arith.constant 0 : index
    %245 = vector.load %arg8[%c22, %c0_75] : memref<32x20xf32, #tpu.memory_space<vmem>>, vector<2x20xf32>
    %cst_76 = arith.constant dense<0.000000e+00> : vector<2x20xf32>
    %246 = tpu.matmul %241, %7, %cst_76 {dimension_numbers = #tpu.dot_dimension_numbers<[1], [0], [0], [1], [0, 0, 1, 1], [], []>} : vector<2x5xf32>, vector<5x20xf32>, vector<2x20xf32> -> vector<2x20xf32>
    %247 = arith.addf %245, %246 : vector<2x20xf32>
    %248 = vector.extract_strided_slice %247 {offsets = [0, 0], sizes = [2, 15], strides = [1, 1]} : vector<2x20xf32> to vector<2x15xf32>
    %249 = arith.negf %248 : vector<2x15xf32>
    %250 = math.exp %249 : vector<2x15xf32>
    %cst_77 = arith.constant 1.000000e+00 : f32
    %251 = vector.broadcast %cst_77 : f32 to vector<2x15xf32>
    %252 = arith.addf %251, %250 : vector<2x15xf32>
    %253 = arith.divf %251, %252 : vector<2x15xf32>
    %254 = vector.extract_strided_slice %247 {offsets = [0, 15], sizes = [2, 5], strides = [1, 1]} : vector<2x20xf32> to vector<2x5xf32>
    %255 = math.tanh %254 : vector<2x5xf32>
    %256 = vector.extract_strided_slice %253 {offsets = [0, 0], sizes = [2, 5], strides = [1, 1]} : vector<2x15xf32> to vector<2x5xf32>
    %257 = vector.extract_strided_slice %253 {offsets = [0, 5], sizes = [2, 5], strides = [1, 1]} : vector<2x15xf32> to vector<2x5xf32>
    %258 = vector.extract_strided_slice %253 {offsets = [0, 10], sizes = [2, 5], strides = [1, 1]} : vector<2x15xf32> to vector<2x5xf32>
    %259 = arith.mulf %257, %239 : vector<2x5xf32>
    %260 = arith.mulf %256, %255 : vector<2x5xf32>
    %261 = arith.addf %259, %260 : vector<2x5xf32>
    %262 = math.tanh %261 : vector<2x5xf32>
    %263 = arith.mulf %258, %262 : vector<2x5xf32>
    %cst_78 = arith.constant 0.000000e+00 : f32
    %264 = vector.broadcast %cst_78 : f32 to vector<2x5xf32>
    %265 = arith.maximumf %263, %264 : vector<2x5xf32>
    %c22_79 = arith.constant 22 : index
    %c0_80 = arith.constant 0 : index
    %266 = vector.load %arg9[%c22_79, %c0_80] : memref<32x5xf32, #tpu.memory_space<vmem>>, vector<2x5xf32>
    tpu.vector_store %arg9[%c22_79, %c0_80], %265 {strides = array<i32>} : memref<32x5xf32, #tpu.memory_space<vmem>>, vector<2x5xf32>,
    %c24 = arith.constant 24 : index
    %c0_81 = arith.constant 0 : index
    %267 = vector.load %arg8[%c24, %c0_81] : memref<32x20xf32, #tpu.memory_space<vmem>>, vector<2x20xf32>
    %cst_82 = arith.constant dense<0.000000e+00> : vector<2x20xf32>
    %268 = tpu.matmul %263, %7, %cst_82 {dimension_numbers = #tpu.dot_dimension_numbers<[1], [0], [0], [1], [0, 0, 1, 1], [], []>} : vector<2x5xf32>, vector<5x20xf32>, vector<2x20xf32> -> vector<2x20xf32>
    %269 = arith.addf %267, %268 : vector<2x20xf32>
    %270 = vector.extract_strided_slice %269 {offsets = [0, 0], sizes = [2, 15], strides = [1, 1]} : vector<2x20xf32> to vector<2x15xf32>
    %271 = arith.negf %270 : vector<2x15xf32>
    %272 = math.exp %271 : vector<2x15xf32>
    %cst_83 = arith.constant 1.000000e+00 : f32
    %273 = vector.broadcast %cst_83 : f32 to vector<2x15xf32>
    %274 = arith.addf %273, %272 : vector<2x15xf32>
    %275 = arith.divf %273, %274 : vector<2x15xf32>
    %276 = vector.extract_strided_slice %269 {offsets = [0, 15], sizes = [2, 5], strides = [1, 1]} : vector<2x20xf32> to vector<2x5xf32>
    %277 = math.tanh %276 : vector<2x5xf32>
    %278 = vector.extract_strided_slice %275 {offsets = [0, 0], sizes = [2, 5], strides = [1, 1]} : vector<2x15xf32> to vector<2x5xf32>
    %279 = vector.extract_strided_slice %275 {offsets = [0, 5], sizes = [2, 5], strides = [1, 1]} : vector<2x15xf32> to vector<2x5xf32>
    %280 = vector.extract_strided_slice %275 {offsets = [0, 10], sizes = [2, 5], strides = [1, 1]} : vector<2x15xf32> to vector<2x5xf32>
    %281 = arith.mulf %279, %261 : vector<2x5xf32>
    %282 = arith.mulf %278, %277 : vector<2x5xf32>
    %283 = arith.addf %281, %282 : vector<2x5xf32>
    %284 = math.tanh %283 : vector<2x5xf32>
    %285 = arith.mulf %280, %284 : vector<2x5xf32>
    %cst_84 = arith.constant 0.000000e+00 : f32
    %286 = vector.broadcast %cst_84 : f32 to vector<2x5xf32>
    %287 = arith.maximumf %285, %286 : vector<2x5xf32>
    %c24_85 = arith.constant 24 : index
    %c0_86 = arith.constant 0 : index
    %288 = vector.load %arg9[%c24_85, %c0_86] : memref<32x5xf32, #tpu.memory_space<vmem>>, vector<2x5xf32>
    tpu.vector_store %arg9[%c24_85, %c0_86], %287 {strides = array<i32>} : memref<32x5xf32, #tpu.memory_space<vmem>>, vector<2x5xf32>,
    %c26 = arith.constant 26 : index
    %c0_87 = arith.constant 0 : index
    %289 = vector.load %arg8[%c26, %c0_87] : memref<32x20xf32, #tpu.memory_space<vmem>>, vector<2x20xf32>
    %cst_88 = arith.constant dense<0.000000e+00> : vector<2x20xf32>
    %290 = tpu.matmul %285, %7, %cst_88 {dimension_numbers = #tpu.dot_dimension_numbers<[1], [0], [0], [1], [0, 0, 1, 1], [], []>} : vector<2x5xf32>, vector<5x20xf32>, vector<2x20xf32> -> vector<2x20xf32>
    %291 = arith.addf %289, %290 : vector<2x20xf32>
    %292 = vector.extract_strided_slice %291 {offsets = [0, 0], sizes = [2, 15], strides = [1, 1]} : vector<2x20xf32> to vector<2x15xf32>
    %293 = arith.negf %292 : vector<2x15xf32>
    %294 = math.exp %293 : vector<2x15xf32>
    %cst_89 = arith.constant 1.000000e+00 : f32
    %295 = vector.broadcast %cst_89 : f32 to vector<2x15xf32>
    %296 = arith.addf %295, %294 : vector<2x15xf32>
    %297 = arith.divf %295, %296 : vector<2x15xf32>
    %298 = vector.extract_strided_slice %291 {offsets = [0, 15], sizes = [2, 5], strides = [1, 1]} : vector<2x20xf32> to vector<2x5xf32>
    %299 = math.tanh %298 : vector<2x5xf32>
    %300 = vector.extract_strided_slice %297 {offsets = [0, 0], sizes = [2, 5], strides = [1, 1]} : vector<2x15xf32> to vector<2x5xf32>
    %301 = vector.extract_strided_slice %297 {offsets = [0, 5], sizes = [2, 5], strides = [1, 1]} : vector<2x15xf32> to vector<2x5xf32>
    %302 = vector.extract_strided_slice %297 {offsets = [0, 10], sizes = [2, 5], strides = [1, 1]} : vector<2x15xf32> to vector<2x5xf32>
    %303 = arith.mulf %301, %283 : vector<2x5xf32>
    %304 = arith.mulf %300, %299 : vector<2x5xf32>
    %305 = arith.addf %303, %304 : vector<2x5xf32>
    %306 = math.tanh %305 : vector<2x5xf32>
    %307 = arith.mulf %302, %306 : vector<2x5xf32>
    %cst_90 = arith.constant 0.000000e+00 : f32
    %308 = vector.broadcast %cst_90 : f32 to vector<2x5xf32>
    %309 = arith.maximumf %307, %308 : vector<2x5xf32>
    %c26_91 = arith.constant 26 : index
    %c0_92 = arith.constant 0 : index
    %310 = vector.load %arg9[%c26_91, %c0_92] : memref<32x5xf32, #tpu.memory_space<vmem>>, vector<2x5xf32>
    tpu.vector_store %arg9[%c26_91, %c0_92], %309 {strides = array<i32>} : memref<32x5xf32, #tpu.memory_space<vmem>>, vector<2x5xf32>,
    %c28 = arith.constant 28 : index
    %c0_93 = arith.constant 0 : index
    %311 = vector.load %arg8[%c28, %c0_93] : memref<32x20xf32, #tpu.memory_space<vmem>>, vector<2x20xf32>
    %cst_94 = arith.constant dense<0.000000e+00> : vector<2x20xf32>
    %312 = tpu.matmul %307, %7, %cst_94 {dimension_numbers = #tpu.dot_dimension_numbers<[1], [0], [0], [1], [0, 0, 1, 1], [], []>} : vector<2x5xf32>, vector<5x20xf32>, vector<2x20xf32> -> vector<2x20xf32>
    %313 = arith.addf %311, %312 : vector<2x20xf32>
    %314 = vector.extract_strided_slice %313 {offsets = [0, 0], sizes = [2, 15], strides = [1, 1]} : vector<2x20xf32> to vector<2x15xf32>
    %315 = arith.negf %314 : vector<2x15xf32>
    %316 = math.exp %315 : vector<2x15xf32>
    %cst_95 = arith.constant 1.000000e+00 : f32
    %317 = vector.broadcast %cst_95 : f32 to vector<2x15xf32>
    %318 = arith.addf %317, %316 : vector<2x15xf32>
    %319 = arith.divf %317, %318 : vector<2x15xf32>
    %320 = vector.extract_strided_slice %313 {offsets = [0, 15], sizes = [2, 5], strides = [1, 1]} : vector<2x20xf32> to vector<2x5xf32>
    %321 = math.tanh %320 : vector<2x5xf32>
    %322 = vector.extract_strided_slice %319 {offsets = [0, 0], sizes = [2, 5], strides = [1, 1]} : vector<2x15xf32> to vector<2x5xf32>
    %323 = vector.extract_strided_slice %319 {offsets = [0, 5], sizes = [2, 5], strides = [1, 1]} : vector<2x15xf32> to vector<2x5xf32>
    %324 = vector.extract_strided_slice %319 {offsets = [0, 10], sizes = [2, 5], strides = [1, 1]} : vector<2x15xf32> to vector<2x5xf32>
    %325 = arith.mulf %323, %305 : vector<2x5xf32>
    %326 = arith.mulf %322, %321 : vector<2x5xf32>
    %327 = arith.addf %325, %326 : vector<2x5xf32>
    %328 = math.tanh %327 : vector<2x5xf32>
    %329 = arith.mulf %324, %328 : vector<2x5xf32>
    %cst_96 = arith.constant 0.000000e+00 : f32
    %330 = vector.broadcast %cst_96 : f32 to vector<2x5xf32>
    %331 = arith.maximumf %329, %330 : vector<2x5xf32>
    %c28_97 = arith.constant 28 : index
    %c0_98 = arith.constant 0 : index
    %332 = vector.load %arg9[%c28_97, %c0_98] : memref<32x5xf32, #tpu.memory_space<vmem>>, vector<2x5xf32>
    tpu.vector_store %arg9[%c28_97, %c0_98], %331 {strides = array<i32>} : memref<32x5xf32, #tpu.memory_space<vmem>>, vector<2x5xf32>,
    %c30 = arith.constant 30 : index
    %c0_99 = arith.constant 0 : index
    %333 = vector.load %arg8[%c30, %c0_99] : memref<32x20xf32, #tpu.memory_space<vmem>>, vector<2x20xf32>
    %cst_100 = arith.constant dense<0.000000e+00> : vector<2x20xf32>
    %334 = tpu.matmul %329, %7, %cst_100 {dimension_numbers = #tpu.dot_dimension_numbers<[1], [0], [0], [1], [0, 0, 1, 1], [], []>} : vector<2x5xf32>, vector<5x20xf32>, vector<2x20xf32> -> vector<2x20xf32>
    %335 = arith.addf %333, %334 : vector<2x20xf32>
    %336 = vector.extract_strided_slice %335 {offsets = [0, 0], sizes = [2, 15], strides = [1, 1]} : vector<2x20xf32> to vector<2x15xf32>
    %337 = arith.negf %336 : vector<2x15xf32>
    %338 = math.exp %337 : vector<2x15xf32>
    %cst_101 = arith.constant 1.000000e+00 : f32
    %339 = vector.broadcast %cst_101 : f32 to vector<2x15xf32>
    %340 = arith.addf %339, %338 : vector<2x15xf32>
    %341 = arith.divf %339, %340 : vector<2x15xf32>
    %342 = vector.extract_strided_slice %335 {offsets = [0, 15], sizes = [2, 5], strides = [1, 1]} : vector<2x20xf32> to vector<2x5xf32>
    %343 = math.tanh %342 : vector<2x5xf32>
    %344 = vector.extract_strided_slice %341 {offsets = [0, 0], sizes = [2, 5], strides = [1, 1]} : vector<2x15xf32> to vector<2x5xf32>
    %345 = vector.extract_strided_slice %341 {offsets = [0, 5], sizes = [2, 5], strides = [1, 1]} : vector<2x15xf32> to vector<2x5xf32>
    %346 = vector.extract_strided_slice %341 {offsets = [0, 10], sizes = [2, 5], strides = [1, 1]} : vector<2x15xf32> to vector<2x5xf32>
    %347 = arith.mulf %345, %327 : vector<2x5xf32>
    %348 = arith.mulf %344, %343 : vector<2x5xf32>
    %349 = arith.addf %347, %348 : vector<2x5xf32>
    %350 = math.tanh %349 : vector<2x5xf32>
    %351 = arith.mulf %346, %350 : vector<2x5xf32>
    %cst_102 = arith.constant 0.000000e+00 : f32
    %352 = vector.broadcast %cst_102 : f32 to vector<2x5xf32>
    %353 = arith.maximumf %351, %352 : vector<2x5xf32>
    %c30_103 = arith.constant 30 : index
    %c0_104 = arith.constant 0 : index
    %354 = vector.load %arg9[%c30_103, %c0_104] : memref<32x5xf32, #tpu.memory_space<vmem>>, vector<2x5xf32>
    tpu.vector_store %arg9[%c30_103, %c0_104], %353 {strides = array<i32>} : memref<32x5xf32, #tpu.memory_space<vmem>>, vector<2x5xf32>,
    %c0_105 = arith.constant 0 : index
    %c0_106 = arith.constant 0 : index
    %355 = vector.load %arg9[%c0_105, %c0_106] : memref<32x5xf32, #tpu.memory_space<vmem>>, vector<28x5xf32>
    %c2_107 = arith.constant 2 : index
    %c0_108 = arith.constant 0 : index
    %356 = vector.load %arg9[%c2_107, %c0_108] : memref<32x5xf32, #tpu.memory_space<vmem>>, vector<28x5xf32>
    %c4_109 = arith.constant 4 : index
    %c0_110 = arith.constant 0 : index
    %357 = vector.load %arg9[%c4_109, %c0_110] : memref<32x5xf32, #tpu.memory_space<vmem>>, vector<28x5xf32>
    %358 = tpu.concatenate %355, %356, %357 in 1 : vector<28x5xf32>, vector<28x5xf32>, vector<28x5xf32> -> vector<28x15xf32>
    %c0_111 = arith.constant 0 : index
    %c0_112 = arith.constant 0 : index
    %359 = vector.load %arg5[%c0_111, %c0_112] : memref<15x50xf32, #tpu.memory_space<vmem>>, vector<15x50xf32>
    %cst_113 = arith.constant dense<0.000000e+00> : vector<28x50xf32>
    %360 = tpu.matmul %358, %359, %cst_113 {dimension_numbers = #tpu.dot_dimension_numbers<[1], [0], [0], [1], [0, 0, 1, 1], [], []>} : vector<28x15xf32>, vector<15x50xf32>, vector<28x50xf32> -> vector<28x50xf32>
    %c0_114 = arith.constant 0 : index
    %c0_115 = arith.constant 0 : index
    %361 = vector.load %arg6[%c0_114, %c0_115] : memref<1x50xf32, #tpu.memory_space<vmem>>, vector<1x50xf32>
    %362 = vector.broadcast %361 : vector<1x50xf32> to vector<28x50xf32>
    %363 = arith.addf %360, %362 : vector<28x50xf32>
    %cst_116 = arith.constant 0.000000e+00 : f32
    %364 = vector.broadcast %cst_116 : f32 to vector<28x50xf32>
    %365 = arith.maximumf %363, %364 : vector<28x50xf32>
    %366 = vector.extract_strided_slice %365 {offsets = [0, 0], sizes = [2, 50], strides = [1, 1]} : vector<28x50xf32> to vector<2x50xf32>
    %367 = vector.extract_strided_slice %365 {offsets = [4, 0], sizes = [2, 50], strides = [1, 1]} : vector<28x50xf32> to vector<2x50xf32>
    %368 = arith.maximumf %366, %367 : vector<2x50xf32>
    %369 = vector.extract_strided_slice %365 {offsets = [8, 0], sizes = [2, 50], strides = [1, 1]} : vector<28x50xf32> to vector<2x50xf32>
    %370 = arith.maximumf %368, %369 : vector<2x50xf32>
    %371 = vector.extract_strided_slice %365 {offsets = [4, 0], sizes = [2, 50], strides = [1, 1]} : vector<28x50xf32> to vector<2x50xf32>
    %372 = vector.extract_strided_slice %365 {offsets = [8, 0], sizes = [2, 50], strides = [1, 1]} : vector<28x50xf32> to vector<2x50xf32>
    %373 = arith.maximumf %371, %372 : vector<2x50xf32>
    %374 = vector.extract_strided_slice %365 {offsets = [12, 0], sizes = [2, 50], strides = [1, 1]} : vector<28x50xf32> to vector<2x50xf32>
    %375 = arith.maximumf %373, %374 : vector<2x50xf32>
    %376 = vector.extract_strided_slice %365 {offsets = [8, 0], sizes = [2, 50], strides = [1, 1]} : vector<28x50xf32> to vector<2x50xf32>
    %377 = vector.extract_strided_slice %365 {offsets = [12, 0], sizes = [2, 50], strides = [1, 1]} : vector<28x50xf32> to vector<2x50xf32>
    %378 = arith.maximumf %376, %377 : vector<2x50xf32>
    %379 = vector.extract_strided_slice %365 {offsets = [16, 0], sizes = [2, 50], strides = [1, 1]} : vector<28x50xf32> to vector<2x50xf32>
    %380 = arith.maximumf %378, %379 : vector<2x50xf32>
    %381 = vector.extract_strided_slice %365 {offsets = [12, 0], sizes = [2, 50], strides = [1, 1]} : vector<28x50xf32> to vector<2x50xf32>
    %382 = vector.extract_strided_slice %365 {offsets = [16, 0], sizes = [2, 50], strides = [1, 1]} : vector<28x50xf32> to vector<2x50xf32>
    %383 = arith.maximumf %381, %382 : vector<2x50xf32>
    %384 = vector.extract_strided_slice %365 {offsets = [20, 0], sizes = [2, 50], strides = [1, 1]} : vector<28x50xf32> to vector<2x50xf32>
    %385 = arith.maximumf %383, %384 : vector<2x50xf32>
    %386 = vector.extract_strided_slice %365 {offsets = [16, 0], sizes = [2, 50], strides = [1, 1]} : vector<28x50xf32> to vector<2x50xf32>
    %387 = vector.extract_strided_slice %365 {offsets = [20, 0], sizes = [2, 50], strides = [1, 1]} : vector<28x50xf32> to vector<2x50xf32>
    %388 = arith.maximumf %386, %387 : vector<2x50xf32>
    %389 = vector.extract_strided_slice %365 {offsets = [24, 0], sizes = [2, 50], strides = [1, 1]} : vector<28x50xf32> to vector<2x50xf32>
    %390 = arith.maximumf %388, %389 : vector<2x50xf32>
    %391 = tpu.concatenate %370, %375, %380, %385, %390 in 0 : vector<2x50xf32>, vector<2x50xf32>, vector<2x50xf32>, vector<2x50xf32>, vector<2x50xf32> -> vector<10x50xf32>
    %c0_117 = arith.constant 0 : index
    %c0_118 = arith.constant 0 : index
    %392 = vector.load %arg7[%c0_117, %c0_118] : memref<10x50xf32, #tpu.memory_space<vmem>>, vector<10x50xf32>
    tpu.vector_store %arg7[%c0_117, %c0_118], %391 {strides = array<i32>} : memref<10x50xf32, #tpu.memory_space<vmem>>, vector<10x50xf32>,
    return
  }
  func.func @transform_0(%arg0: i32) -> (i32, i32) {
    %c0_i32 = arith.constant 0 : i32
    %c0_i32_0 = arith.constant 0 : i32
    %c0_i32_1 = arith.constant 0 : i32
    return %c0_i32, %c0_i32_0 : i32, i32
  }
  func.func @transform_1(%arg0: i32) -> (i32, i32) {
    %c0_i32 = arith.constant 0 : i32
    %c0_i32_0 = arith.constant 0 : i32
    %c0_i32_1 = arith.constant 0 : i32
    return %c0_i32, %c0_i32_0 : i32, i32
  }
  func.func @transform_2(%arg0: i32) -> (i32, i32) {
    %c0_i32 = arith.constant 0 : i32
    %c0_i32_0 = arith.constant 0 : i32
    %c0_i32_1 = arith.constant 0 : i32
    return %c0_i32, %c0_i32_0 : i32, i32
  }
  func.func @transform_3(%arg0: i32) -> (i32, i32) {
    %c0_i32 = arith.constant 0 : i32
    %c0_i32_0 = arith.constant 0 : i32
    %c0_i32_1 = arith.constant 0 : i32
    return %c0_i32, %c0_i32_0 : i32, i32
  }
  func.func @transform_4(%arg0: i32) -> (i32, i32) {
    %c0_i32 = arith.constant 0 : i32
    %c0_i32_0 = arith.constant 0 : i32
    %c0_i32_1 = arith.constant 0 : i32
    return %c0_i32, %c0_i32_0 : i32, i32
  }
  func.func @transform_5(%arg0: i32) -> (i32, i32) {
    %c0_i32 = arith.constant 0 : i32
    %c0_i32_0 = arith.constant 0 : i32
    %c0_i32_1 = arith.constant 0 : i32
    return %c0_i32, %c0_i32_0 : i32, i32
  }
  func.func @transform_6(%arg0: i32) -> (i32, i32) {
    %c0_i32 = arith.constant 0 : i32
    %c0_i32_0 = arith.constant 0 : i32
    %c0_i32_1 = arith.constant 0 : i32
    return %c0_i32, %c0_i32_0 : i32, i32
  }
}

</mosaic_0001>

<llo_original>
// kernel: tpu_custom_call.1
$region0: #{tpu_custom_call.1}
  #allocation0 [shape = 'u32[]', space=smem, size = 0x4, offset = 0x4, fixed_abs, tag = 'smem constant byte address 0x4 - core index']
  #allocation1 [shape = 'u32[72,128]{1,0:T(1,128)}', space=vmem, size = 0x9000, scoped, tag = 'internal scratch']
  #allocation2 [shape = 'f32[32,20]{1,0:T(8,128)}', space=vmem, size = 0x4000, scoped, tag = 'scratch operand']
  #allocation3 [shape = 'f32[32,5]{1,0:T(8,128)}', space=vmem, size = 0x4000, scoped, tag = 'scratch operand']
  %s0 = inlined_call_operand.vmem [shape: f32[32,100], index: 0, kind: input, shape index: {}]
  %s1 = inlined_call_operand.vmem [shape: f32[100,20], index: 1, kind: input, shape index: {}]
  %s2 = inlined_call_operand.vmem [shape: f32[5,20], index: 2, kind: input, shape index: {}]
  %s3 = inlined_call_operand.vmem [shape: f32[1,20], index: 3, kind: input, shape index: {}]
  %s4 = inlined_call_operand.vmem [shape: f32[15,50], index: 4, kind: input, shape index: {}]
  %s5 = inlined_call_operand.vmem [shape: f32[1,50], index: 5, kind: input, shape index: {}]
  %s6 = inlined_call_operand.hbm [shape: f32[10,50], index: 6, kind: output, shape index: {}]
  %s7 = sld [smem:[#allocation0]]
  $region34: #{tpu_custom_call.1} parent=0
    _
  %s9 = ssub.s32 1, %s7
  %s10 = scalar_select 0, %s9, %s7
  $region1: #{tpu_custom_call.1} parent=0
    #allocation4 [shape = 'u8[8192]{0}', space=vmem, size = 0x2000, scoped, tag = 'output window, operand 0, single buffered']
    #allocation5 [shape = 's32[1]{0}', space=sflag, size = 0x4, scoped, tag = 'scoped memory for tpu_custom_call.1']
    %11 = vsyncpa [#allocation5], 0
    // Predicated region
    $region2: #{tpu_custom_call.1} parent=1 // pred_check
      _
    $region3: #{tpu_custom_call.1} parent=1 // pred_check_branch
      %13 = sbr.rel (0) target = $region5
    $region4: #{tpu_custom_call.1} parent=1 // pred_region
      _
    $region5: #{tpu_custom_call.1} parent=1 // pred_fallthru
      _
    // Predicated region
    $region6: #{tpu_custom_call.1} parent=1 // pred_check
      _
    $region7: #{tpu_custom_call.1} parent=1 // pred_check_branch
      %15 = sbr.rel (0) target = $region9
    $region8: #{tpu_custom_call.1} parent=1 // pred_region
      _
    $region9: #{tpu_custom_call.1} parent=1 // pred_fallthru
      _
    // Predicated region
    $region10: #{tpu_custom_call.1} parent=1 // pred_check
      _
    $region11: #{tpu_custom_call.1} parent=1 // pred_check_branch
      %17 = sbr.rel (0) target = $region13
    $region12: #{tpu_custom_call.1} parent=1 // pred_region
      _
    $region13: #{tpu_custom_call.1} parent=1 // pred_fallthru
      _
    // Predicated region
    $region14: #{tpu_custom_call.1} parent=1 // pred_check
      _
    $region15: #{tpu_custom_call.1} parent=1 // pred_check_branch
      %19 = sbr.rel (0) target = $region17
    $region16: #{tpu_custom_call.1} parent=1 // pred_region
      _
    $region17: #{tpu_custom_call.1} parent=1 // pred_fallthru
      _
    // Predicated region
    $region18: #{tpu_custom_call.1} parent=1 // pred_check
      _
    $region19: #{tpu_custom_call.1} parent=1 // pred_check_branch
      %21 = sbr.rel (0) target = $region21
    $region20: #{tpu_custom_call.1} parent=1 // pred_region
      _
    $region21: #{tpu_custom_call.1} parent=1 // pred_fallthru
      _
    // Predicated region
    $region22: #{tpu_custom_call.1} parent=1 // pred_check
      _
    $region23: #{tpu_custom_call.1} parent=1 // pred_check_branch
      %23 = sbr.rel (0) target = $region25
    $region24: #{tpu_custom_call.1} parent=1 // pred_region
      _
    $region25: #{tpu_custom_call.1} parent=1 // pred_fallthru
      _
    %v24 = vld [vmem:[%s0] sm:$0xff]
    %v25 = vld [vmem:[%s0 + $0x8] sm:$0xff]
    %v26 = vld [vmem:[%s0 + $0x10] sm:$0xff]
    %v27 = vld [vmem:[%s0 + $0x18] sm:$0xff]
    %v28 = vld [vmem:[%s1] sm:$0xff]
    %v29 = vld [vmem:[%s1 + $0x8] sm:$0xff]
    %v30 = vld [vmem:[%s1 + $0x10] sm:$0xff]
    %v31 = vld [vmem:[%s1 + $0x18] sm:$0xff]
    %v32 = vld [vmem:[%s1 + $0x20] sm:$0xff]
    %v33 = vld [vmem:[%s1 + $0x28] sm:$0xff]
    %v34 = vld [vmem:[%s1 + $0x30] sm:$0xff]
    %v35 = vld [vmem:[%s1 + $0x38] sm:$0xff]
    %v36 = vld [vmem:[%s1 + $0x40] sm:$0xff]
    %v37 = vld [vmem:[%s1 + $0x48] sm:$0xff]
    %v38 = vld [vmem:[%s1 + $0x50] sm:$0xff]
    %v39 = vld [vmem:[%s1 + $0x58] sm:$0xff]
    %v40 = vld [vmem:[%s1 + $0x60] sm:$0xf]
    %v41 = vld [vmem:[%s3] sm:$0x1]
    %v43 = vperm.slane %v41, 0
    %vm45 = vcmask 818176
    %v47 = vsel %vm45, %v24, 0
    %v50 = vsel %vm45, %v25, 0
    %v53 = vsel %vm45, %v26, 0
    %v56 = vsel %vm45, %v27, 0
    %vm58 = vcmask 1043456
    %v60 = vsel %vm58, %v40, 0
    %62 = vmatpush.msra.mxu0 0.0
    %63 = vmatpush.msra.mxu0 0.0
    %64 = vmatpush.msra.mxu0 0.0
    %65 = vmatpush.msra.mxu0 %v60
    %66 = vmatpush.msra.mxu0 %v39
    %67 = vmatpush.msra.mxu0 %v38
    %68 = vmatpush.msra.mxu0 %v37
    %69 = vmatpush.msra.mxu0 %v36
    %70 = vmatpush.msra.mxu0 %v35
    %71 = vmatpush.msra.mxu0 %v34
    %72 = vmatpush.msra.mxu0 %v33
    %73 = vmatpush.msra.mxu0 %v32
    %74 = vmatpush.msra.mxu0 %v31
    %75 = vmatpush.msra.mxu0 %v30
    %76 = vmatpush.msra.mxu0 %v29
    %77 = vmatpush.msra.mxu0 %v28
    %78 = vmatmul.f32.gmra.mxu0 %v47
    %v79 = vpop.f32.mrf.mxu0
    %v80 = vadd.f32 %v43, %v79
    %81 = vmatmul.f32.gmra.mxu0 %v50
    %v82 = vpop.f32.mrf.mxu0
    %v83 = vadd.f32 %v43, %v82
    %84 = vmatmul.f32.gmra.mxu0 %v53
    %v85 = vpop.f32.mrf.mxu0
    %v86 = vadd.f32 %v43, %v85
    %87 = vmatmul.f32.gmra.mxu0 %v56
    %v88 = vpop.f32.mrf.mxu0
    %v89 = vadd.f32 %v43, %v88
    %90 = vdwg.mxu0
    %vm91 = vcmask 162816
    %92 = vst.msk [vmem:[#allocation2] sm:$0xff] %vm91, %v80
    %93 = vst.msk [vmem:[#allocation2 + $0x8] sm:$0xff] %vm91, %v83
    %94 = vst.msk [vmem:[#allocation2 + $0x10] sm:$0xff] %vm91, %v86
    %95 = vst.msk [vmem:[#allocation2 + $0x18] sm:$0xff] %vm91, %v89
    %v96 = vld [vmem:[%s2] sm:$0x1f]
    %v97 = vld [vmem:[#allocation2] sm:$0x3]
    %v98 = vxor.u32 %v97, 2147483648
    %v99 = vmul.f32 %v98, 1.442695
    %v100 = vpow.pop %v99
    %v101 = vadd.f32 %v100, 1.0
    %v102 = vrcp.pop %v101
    %v103 = vmul.f32 %v101, %v102
    %v104 = vsub.f32 1.0, %v103
    %v105 = vmul.f32 %v102, %v104
    %v106 = vadd.f32 %v102, %v105
    %vm107 = vweird.f32 %v101
    %vm108 = vweird.f32 %v102
    %vm109 = vmor %vm107, %vm108
    %v110 = vsel %vm109, %v102, %v106
    %v111 = vand.u32 2147483647, %v101
    %vm112 = vcmp.eq.f32.partialorder %v111, 8.507059e+37
    %v113 = vand.u32 %v101, 2147483648
    %v114 = vor.u32 1.1754944e-38, %v113
    %v115 = vsel %vm112, %v114, %v110
    %v116 = vmul.f32 1.0, %v115
    %v117 = vtanh.pop %v97
    %119 = vrot.lane.b32.xlu0 %v117, 113
    %v120 = vpop.permute.xlu0 %119
    %v122 = vmul.f32 %v116, %v120
    %v123 = vtanh.pop %v122
    %125 = vrot.lane.b32.xlu0 %v123, 10
    %v126 = vpop.permute.xlu0 %125
    %v128 = vmul.f32 %v116, %v126
    %v129 = vmax.f32 %v128, 0.0
    %131 = vrot.lane.b32.xlu0 %v129, 118
    %v132 = vpop.permute.xlu0 %131
    %vm134 = vcmask 33792
    %135 = vst.msk [vmem:[#allocation3] sm:$0x3] %vm134, %v132
    %v136 = vld [vmem:[#allocation2 + $0x2] sm:$0x3]
    %138 = vrot.lane.b32.xlu0 %v128, 118
    %v139 = vpop.permute.xlu0 %138
    %vm140 = vcmask 39936
    %v141 = vsel %vm140, %v139, 0
    %vm143 = vcmask 1044480
    %v145 = vsel %vm143, %v96, 0
    %147 = vmatpush.msra.mxu0 0.0
    %148 = vmatpush.msra.mxu0 0.0
    %149 = vmatpush.msra.mxu0 0.0
    %150 = vmatpush.msra.mxu0 0.0
    %151 = vmatpush.msra.mxu0 0.0
    %152 = vmatpush.msra.mxu0 0.0
    %153 = vmatpush.msra.mxu0 0.0
    %154 = vmatpush.msra.mxu0 0.0
    %155 = vmatpush.msra.mxu0 0.0
    %156 = vmatpush.msra.mxu0 0.0
    %157 = vmatpush.msra.mxu0 0.0
    %158 = vmatpush.msra.mxu0 0.0
    %159 = vmatpush.msra.mxu0 0.0
    %160 = vmatpush.msra.mxu0 0.0
    %161 = vmatpush.msra.mxu0 0.0
    %162 = vmatpush.msra.mxu0 %v145
    %163 = vmatmul.f32.gmra.mxu0 %v141
    %v164 = vpop.f32.mrf.mxu0
    %v165 = vadd.f32 0.0, %v164
    %166 = vdwg.mxu0
    %v167 = vadd.f32 %v136, %v165
    %v168 = vxor.u32 %v167, 2147483648
    %v169 = vmul.f32 %v168, 1.442695
    %v170 = vpow.pop %v169
    %v171 = vadd.f32 %v170, 1.0
    %v172 = vrcp.pop %v171
    %v173 = vmul.f32 %v171, %v172
    %v174 = vsub.f32 1.0, %v173
    %v175 = vmul.f32 %v172, %v174
    %v176 = vadd.f32 %v172, %v175
    %vm177 = vweird.f32 %v171
    %vm178 = vweird.f32 %v172
    %vm179 = vmor %vm177, %vm178
    %v180 = vsel %vm179, %v172, %v176
    %v181 = vand.u32 2147483647, %v171
    %vm182 = vcmp.eq.f32.partialorder %v181, 8.507059e+37
    %v183 = vand.u32 %v171, 2147483648
    %v184 = vor.u32 1.1754944e-38, %v183
    %v185 = vsel %vm182, %v184, %v180
    %v186 = vmul.f32 1.0, %v185
    %v187 = vtanh.pop %v167
    %189 = vrot.lane.b32.xlu0 %v122, 5
    %v190 = vpop.permute.xlu0 %189
    %v192 = vmul.f32 %v186, %v190
    %194 = vrot.lane.b32.xlu0 %v187, 113
    %v195 = vpop.permute.xlu0 %194
    %v197 = vmul.f32 %v186, %v195
    %199 = vrot.lane.b32.xlu0 %v197, 5
    %v200 = vpop.permute.xlu0 %199
    %v202 = vadd.f32 %v192, %v200
    %v203 = vtanh.pop %v202
    %205 = vrot.lane.b32.xlu0 %v203, 5
    %v206 = vpop.permute.xlu0 %205
    %v208 = vmul.f32 %v186, %v206
    %v209 = vmax.f32 %v208, 0.0
    %211 = vrot.lane.b32.xlu0 %v209, 118
    %v212 = vpop.permute.xlu0 %211
    %214 = vst.msk [vmem:[#allocation3 + $0x2] sm:$0x3] %vm134, %v212
    %v215 = vld [vmem:[#allocation2 + $0x4] sm:$0x3]
    %217 = vrot.lane.b32.xlu0 %v208, 118
    %v218 = vpop.permute.xlu0 %217
    %v219 = vsel %vm140, %v218, 0
    %221 = vmatpush.msra.mxu0 0.0
    %222 = vmatpush.msra.mxu0 0.0
    %223 = vmatpush.msra.mxu0 0.0
    %224 = vmatpush.msra.mxu0 0.0
    %225 = vmatpush.msra.mxu0 0.0
    %226 = vmatpush.msra.mxu0 0.0
    %227 = vmatpush.msra.mxu0 0.0
    %228 = vmatpush.msra.mxu0 0.0
    %229 = vmatpush.msra.mxu0 0.0
    %230 = vmatpush.msra.mxu0 0.0
    %231 = vmatpush.msra.mxu0 0.0
    %232 = vmatpush.msra.mxu0 0.0
    %233 = vmatpush.msra.mxu0 0.0
    %234 = vmatpush.msra.mxu0 0.0
    %235 = vmatpush.msra.mxu0 0.0
    %236 = vmatpush.msra.mxu0 %v145
    %237 = vmatmul.f32.gmra.mxu0 %v219
    %v238 = vpop.f32.mrf.mxu0
    %v239 = vadd.f32 0.0, %v238
    %240 = vdwg.mxu0
    %v241 = vadd.f32 %v215, %v239
    %v242 = vxor.u32 %v241, 2147483648
    %v243 = vmul.f32 %v242, 1.442695
    %v244 = vpow.pop %v243
    %v245 = vadd.f32 %v244, 1.0
    %v246 = vrcp.pop %v245
    %v247 = vmul.f32 %v245, %v246
    %v248 = vsub.f32 1.0, %v247
    %v249 = vmul.f32 %v246, %v248
    %v250 = vadd.f32 %v246, %v249
    %vm251 = vweird.f32 %v245
    %vm252 = vweird.f32 %v246
    %vm253 = vmor %vm251, %vm252
    %v254 = vsel %vm253, %v246, %v250
    %v255 = vand.u32 2147483647, %v245
    %vm256 = vcmp.eq.f32.partialorder %v255, 8.507059e+37
    %v257 = vand.u32 %v245, 2147483648
    %v258 = vor.u32 1.1754944e-38, %v257
    %v259 = vsel %vm256, %v258, %v254
    %v260 = vmul.f32 1.0, %v259
    %v261 = vtanh.pop %v241
    %v262 = vmul.f32 %v260, %v202
    %264 = vrot.lane.b32.xlu0 %v261, 113
    %v265 = vpop.permute.xlu0 %264
    %v267 = vmul.f32 %v260, %v265
    %269 = vrot.lane.b32.xlu0 %v267, 5
    %v270 = vpop.permute.xlu0 %269
    %v272 = vadd.f32 %v262, %v270
    %v273 = vtanh.pop %v272
    %275 = vrot.lane.b32.xlu0 %v273, 5
    %v276 = vpop.permute.xlu0 %275
    %v278 = vmul.f32 %v260, %v276
    %v279 = vmax.f32 %v278, 0.0
    %281 = vrot.lane.b32.xlu0 %v279, 118
    %v282 = vpop.permute.xlu0 %281
    %284 = vst.msk [vmem:[#allocation3 + $0x4] sm:$0x3] %vm134, %v282
    %v285 = vld [vmem:[#allocation2 + $0x6] sm:$0x3]
    %287 = vrot.lane.b32.xlu0 %v278, 118
    %v288 = vpop.permute.xlu0 %287
    %v289 = vsel %vm140, %v288, 0
    %291 = vmatpush.msra.mxu0 0.0
    %292 = vmatpush.msra.mxu0 0.0
    %293 = vmatpush.msra.mxu0 0.0
    %294 = vmatpush.msra.mxu0 0.0
    %295 = vmatpush.msra.mxu0 0.0
    %296 = vmatpush.msra.mxu0 0.0
    %297 = vmatpush.msra.mxu0 0.0
    %298 = vmatpush.msra.mxu0 0.0
    %299 = vmatpush.msra.mxu0 0.0
    %300 = vmatpush.msra.mxu0 0.0
    %301 = vmatpush.msra.mxu0 0.0
    %302 = vmatpush.msra.mxu0 0.0
    %303 = vmatpush.msra.mxu0 0.0
    %304 = vmatpush.msra.mxu0 0.0
    %305 = vmatpush.msra.mxu0 0.0
    %306 = vmatpush.msra.mxu0 %v145
    %307 = vmatmul.f32.gmra.mxu0 %v289
    %v308 = vpop.f32.mrf.mxu0
    %v309 = vadd.f32 0.0, %v308
    %310 = vdwg.mxu0
    %v311 = vadd.f32 %v285, %v309
    %v312 = vxor.u32 %v311, 2147483648
    %v313 = vmul.f32 %v312, 1.442695
    %v314 = vpow.pop %v313
    %v315 = vadd.f32 %v314, 1.0
    %v316 = vrcp.pop %v315
    %v317 = vmul.f32 %v315, %v316
    %v318 = vsub.f32 1.0, %v317
    %v319 = vmul.f32 %v316, %v318
    %v320 = vadd.f32 %v316, %v319
    %vm321 = vweird.f32 %v315
    %vm322 = vweird.f32 %v316
    %vm323 = vmor %vm321, %vm322
    %v324 = vsel %vm323, %v316, %v320
    %v325 = vand.u32 2147483647, %v315
    %vm326 = vcmp.eq.f32.partialorder %v325, 8.507059e+37
    %v327 = vand.u32 %v315, 2147483648
    %v328 = vor.u32 1.1754944e-38, %v327
    %v329 = vsel %vm326, %v328, %v324
    %v330 = vmul.f32 1.0, %v329
    %v331 = vtanh.pop %v311
    %v332 = vmul.f32 %v330, %v272
    %334 = vrot.lane.b32.xlu0 %v331, 113
    %v335 = vpop.permute.xlu0 %334
    %v337 = vmul.f32 %v330, %v335
    %339 = vrot.lane.b32.xlu0 %v337, 5
    %v340 = vpop.permute.xlu0 %339
    %v342 = vadd.f32 %v332, %v340
    %v343 = vtanh.pop %v342
    %345 = vrot.lane.b32.xlu0 %v343, 5
    %v346 = vpop.permute.xlu0 %345
    %v348 = vmul.f32 %v330, %v346
    %v349 = vmax.f32 %v348, 0.0
    %351 = vrot.lane.b32.xlu0 %v349, 118
    %v352 = vpop.permute.xlu0 %351
    %354 = vst.msk [vmem:[#allocation3 + $0x6] sm:$0x3] %vm134, %v352
    %v355 = vld [vmem:[#allocation2 + $0x8] sm:$0x3]
    %357 = vrot.lane.b32.xlu0 %v348, 118
    %v358 = vpop.permute.xlu0 %357
    %v359 = vsel %vm140, %v358, 0
    %361 = vmatpush.msra.mxu0 0.0
    %362 = vmatpush.msra.mxu0 0.0
    %363 = vmatpush.msra.mxu0 0.0
    %364 = vmatpush.msra.mxu0 0.0
    %365 = vmatpush.msra.mxu0 0.0
    %366 = vmatpush.msra.mxu0 0.0
    %367 = vmatpush.msra.mxu0 0.0
    %368 = vmatpush.msra.mxu0 0.0
    %369 = vmatpush.msra.mxu0 0.0
    %370 = vmatpush.msra.mxu0 0.0
    %371 = vmatpush.msra.mxu0 0.0
    %372 = vmatpush.msra.mxu0 0.0
    %373 = vmatpush.msra.mxu0 0.0
    %374 = vmatpush.msra.mxu0 0.0
    %375 = vmatpush.msra.mxu0 0.0
    %376 = vmatpush.msra.mxu0 %v145
    %377 = vmatmul.f32.gmra.mxu0 %v359
    %v378 = vpop.f32.mrf.mxu0
    %v379 = vadd.f32 0.0, %v378
    %380 = vdwg.mxu0
    %v381 = vadd.f32 %v355, %v379
    %v382 = vxor.u32 %v381, 2147483648
    %v383 = vmul.f32 %v382, 1.442695
    %v384 = vpow.pop %v383
    %v385 = vadd.f32 %v384, 1.0
    %v386 = vrcp.pop %v385
    %v387 = vmul.f32 %v385, %v386
    %v388 = vsub.f32 1.0, %v387
    %v389 = vmul.f32 %v386, %v388
    %v390 = vadd.f32 %v386, %v389
    %vm391 = vweird.f32 %v385
    %vm392 = vweird.f32 %v386
    %vm393 = vmor %vm391, %vm392
    %v394 = vsel %vm393, %v386, %v390
    %v395 = vand.u32 2147483647, %v385
    %vm396 = vcmp.eq.f32.partialorder %v395, 8.507059e+37
    %v397 = vand.u32 %v385, 2147483648
    %v398 = vor.u32 1.1754944e-38, %v397
    %v399 = vsel %vm396, %v398, %v394
    %v400 = vmul.f32 1.0, %v399
    %v401 = vtanh.pop %v381
    %v402 = vmul.f32 %v400, %v342
    %404 = vrot.lane.b32.xlu0 %v401, 113
    %v405 = vpop.permute.xlu0 %404
    %v407 = vmul.f32 %v400, %v405
    %409 = vrot.lane.b32.xlu0 %v407, 5
    %v410 = vpop.permute.xlu0 %409
    %v412 = vadd.f32 %v402, %v410
    %v413 = vtanh.pop %v412
    %415 = vrot.lane.b32.xlu0 %v413, 5
    %v416 = vpop.permute.xlu0 %415
    %v418 = vmul.f32 %v400, %v416
    %v419 = vmax.f32 %v418, 0.0
    %421 = vrot.lane.b32.xlu0 %v419, 118
    %v422 = vpop.permute.xlu0 %421
    %424 = vst.msk [vmem:[#allocation3 + $0x8] sm:$0x3] %vm134, %v422
    %v425 = vld [vmem:[#allocation2 + $0xa] sm:$0x3]
    %427 = vrot.lane.b32.xlu0 %v418, 118
    %v428 = vpop.permute.xlu0 %427
    %v429 = vsel %vm140, %v428, 0
    %431 = vmatpush.msra.mxu0 0.0
    %432 = vmatpush.msra.mxu0 0.0
    %433 = vmatpush.msra.mxu0 0.0
    %434 = vmatpush.msra.mxu0 0.0
    %435 = vmatpush.msra.mxu0 0.0
    %436 = vmatpush.msra.mxu0 0.0
    %437 = vmatpush.msra.mxu0 0.0
    %438 = vmatpush.msra.mxu0 0.0
    %439 = vmatpush.msra.mxu0 0.0
    %440 = vmatpush.msra.mxu0 0.0
    %441 = vmatpush.msra.mxu0 0.0
    %442 = vmatpush.msra.mxu0 0.0
    %443 = vmatpush.msra.mxu0 0.0
    %444 = vmatpush.msra.mxu0 0.0
    %445 = vmatpush.msra.mxu0 0.0
    %446 = vmatpush.msra.mxu0 %v145
    %447 = vmatmul.f32.gmra.mxu0 %v429
    %v448 = vpop.f32.mrf.mxu0
    %v449 = vadd.f32 0.0, %v448
    %450 = vdwg.mxu0
    %v451 = vadd.f32 %v425, %v449
    %v452 = vxor.u32 %v451, 2147483648
    %v453 = vmul.f32 %v452, 1.442695
    %v454 = vpow.pop %v453
    %v455 = vadd.f32 %v454, 1.0
    %v456 = vrcp.pop %v455
    %v457 = vmul.f32 %v455, %v456
    %v458 = vsub.f32 1.0, %v457
    %v459 = vmul.f32 %v456, %v458
    %v460 = vadd.f32 %v456, %v459
    %vm461 = vweird.f32 %v455
    %vm462 = vweird.f32 %v456
    %vm463 = vmor %vm461, %vm462
    %v464 = vsel %vm463, %v456, %v460
    %v465 = vand.u32 2147483647, %v455
    %vm466 = vcmp.eq.f32.partialorder %v465, 8.507059e+37
    %v467 = vand.u32 %v455, 2147483648
    %v468 = vor.u32 1.1754944e-38, %v467
    %v469 = vsel %vm466, %v468, %v464
    %v470 = vmul.f32 1.0, %v469
    %v471 = vtanh.pop %v451
    %v472 = vmul.f32 %v470, %v412
    %474 = vrot.lane.b32.xlu0 %v471, 113
    %v475 = vpop.permute.xlu0 %474
    %v477 = vmul.f32 %v470, %v475
    %479 = vrot.lane.b32.xlu0 %v477, 5
    %v480 = vpop.permute.xlu0 %479
    %v482 = vadd.f32 %v472, %v480
    %v483 = vtanh.pop %v482
    %485 = vrot.lane.b32.xlu0 %v483, 5
    %v486 = vpop.permute.xlu0 %485
    %v488 = vmul.f32 %v470, %v486
    %v489 = vmax.f32 %v488, 0.0
    %491 = vrot.lane.b32.xlu0 %v489, 118
    %v492 = vpop.permute.xlu0 %491
    %494 = vst.msk [vmem:[#allocation3 + $0xa] sm:$0x3] %vm134, %v492
    %v495 = vld [vmem:[#allocation2 + $0xc] sm:$0x3]
    %497 = vrot.lane.b32.xlu0 %v488, 118
    %v498 = vpop.permute.xlu0 %497
    %v499 = vsel %vm140, %v498, 0
    %501 = vmatpush.msra.mxu0 0.0
    %502 = vmatpush.msra.mxu0 0.0
    %503 = vmatpush.msra.mxu0 0.0
    %504 = vmatpush.msra.mxu0 0.0
    %505 = vmatpush.msra.mxu0 0.0
    %506 = vmatpush.msra.mxu0 0.0
    %507 = vmatpush.msra.mxu0 0.0
    %508 = vmatpush.msra.mxu0 0.0
    %509 = vmatpush.msra.mxu0 0.0
    %510 = vmatpush.msra.mxu0 0.0
    %511 = vmatpush.msra.mxu0 0.0
    %512 = vmatpush.msra.mxu0 0.0
    %513 = vmatpush.msra.mxu0 0.0
    %514 = vmatpush.msra.mxu0 0.0
    %515 = vmatpush.msra.mxu0 0.0
    %516 = vmatpush.msra.mxu0 %v145
    %517 = vmatmul.f32.gmra.mxu0 %v499
    %v518 = vpop.f32.mrf.mxu0
    %v519 = vadd.f32 0.0, %v518
    %520 = vdwg.mxu0
    %v521 = vadd.f32 %v495, %v519
    %v522 = vxor.u32 %v521, 2147483648
    %v523 = vmul.f32 %v522, 1.442695
    %v524 = vpow.pop %v523
    %v525 = vadd.f32 %v524, 1.0
    %v526 = vrcp.pop %v525
    %v527 = vmul.f32 %v525, %v526
    %v528 = vsub.f32 1.0, %v527
    %v529 = vmul.f32 %v526, %v528
    %v530 = vadd.f32 %v526, %v529
    %vm531 = vweird.f32 %v525
    %vm532 = vweird.f32 %v526
    %vm533 = vmor %vm531, %vm532
    %v534 = vsel %vm533, %v526, %v530
    %v535 = vand.u32 2147483647, %v525
    %vm536 = vcmp.eq.f32.partialorder %v535, 8.507059e+37
    %v537 = vand.u32 %v525, 2147483648
    %v538 = vor.u32 1.1754944e-38, %v537
    %v539 = vsel %vm536, %v538, %v534
    %v540 = vmul.f32 1.0, %v539
    %v541 = vtanh.pop %v521
    %v542 = vmul.f32 %v540, %v482
    %544 = vrot.lane.b32.xlu0 %v541, 113
    %v545 = vpop.permute.xlu0 %544
    %v547 = vmul.f32 %v540, %v545
    %549 = vrot.lane.b32.xlu0 %v547, 5
    %v550 = vpop.permute.xlu0 %549
    %v552 = vadd.f32 %v542, %v550
    %v553 = vtanh.pop %v552
    %555 = vrot.lane.b32.xlu0 %v553, 5
    %v556 = vpop.permute.xlu0 %555
    %v558 = vmul.f32 %v540, %v556
    %v559 = vmax.f32 %v558, 0.0
    %561 = vrot.lane.b32.xlu0 %v559, 118
    %v562 = vpop.permute.xlu0 %561
    %564 = vst.msk [vmem:[#allocation3 + $0xc] sm:$0x3] %vm134, %v562
    %v565 = vld [vmem:[#allocation2 + $0xe] sm:$0x3]
    %567 = vrot.lane.b32.xlu0 %v558, 118
    %v568 = vpop.permute.xlu0 %567
    %v569 = vsel %vm140, %v568, 0
    %571 = vmatpush.msra.mxu0 0.0
    %572 = vmatpush.msra.mxu0 0.0
    %573 = vmatpush.msra.mxu0 0.0
    %574 = vmatpush.msra.mxu0 0.0
    %575 = vmatpush.msra.mxu0 0.0
    %576 = vmatpush.msra.mxu0 0.0
    %577 = vmatpush.msra.mxu0 0.0
    %578 = vmatpush.msra.mxu0 0.0
    %579 = vmatpush.msra.mxu0 0.0
    %580 = vmatpush.msra.mxu0 0.0
    %581 = vmatpush.msra.mxu0 0.0
    %582 = vmatpush.msra.mxu0 0.0
    %583 = vmatpush.msra.mxu0 0.0
    %584 = vmatpush.msra.mxu0 0.0
    %585 = vmatpush.msra.mxu0 0.0
    %586 = vmatpush.msra.mxu0 %v145
    %587 = vmatmul.f32.gmra.mxu0 %v569
    %v588 = vpop.f32.mrf.mxu0
    %v589 = vadd.f32 0.0, %v588
    %590 = vdwg.mxu0
    %v591 = vadd.f32 %v565, %v589
    %v592 = vxor.u32 %v591, 2147483648
    %v593 = vmul.f32 %v592, 1.442695
    %v594 = vpow.pop %v593
    %v595 = vadd.f32 %v594, 1.0
    %v596 = vrcp.pop %v595
    %v597 = vmul.f32 %v595, %v596
    %v598 = vsub.f32 1.0, %v597
    %v599 = vmul.f32 %v596, %v598
    %v600 = vadd.f32 %v596, %v599
    %vm601 = vweird.f32 %v595
    %vm602 = vweird.f32 %v596
    %vm603 = vmor %vm601, %vm602
    %v604 = vsel %vm603, %v596, %v600
    %v605 = vand.u32 2147483647, %v595
    %vm606 = vcmp.eq.f32.partialorder %v605, 8.507059e+37
    %v607 = vand.u32 %v595, 2147483648
    %v608 = vor.u32 1.1754944e-38, %v607
    %v609 = vsel %vm606, %v608, %v604
    %v610 = vmul.f32 1.0, %v609
    %v611 = vtanh.pop %v591
    %v612 = vmul.f32 %v610, %v552
    %614 = vrot.lane.b32.xlu0 %v611, 113
    %v615 = vpop.permute.xlu0 %614
    %v617 = vmul.f32 %v610, %v615
    %619 = vrot.lane.b32.xlu0 %v617, 5
    %v620 = vpop.permute.xlu0 %619
    %v622 = vadd.f32 %v612, %v620
    %v623 = vtanh.pop %v622
    %625 = vrot.lane.b32.xlu0 %v623, 5
    %v626 = vpop.permute.xlu0 %625
    %v628 = vmul.f32 %v610, %v626
    %v629 = vmax.f32 %v628, 0.0
    %631 = vrot.lane.b32.xlu0 %v629, 118
    %v632 = vpop.permute.xlu0 %631
    %634 = vst.msk [vmem:[#allocation3 + $0xe] sm:$0x3] %vm134, %v632
    %v635 = vld [vmem:[#allocation2 + $0x10] sm:$0x3]
    %637 = vrot.lane.b32.xlu0 %v628, 118
    %v638 = vpop.permute.xlu0 %637
    %v639 = vsel %vm140, %v638, 0
    %641 = vmatpush.msra.mxu0 0.0
    %642 = vmatpush.msra.mxu0 0.0
    %643 = vmatpush.msra.mxu0 0.0
    %644 = vmatpush.msra.mxu0 0.0
    %645 = vmatpush.msra.mxu0 0.0
    %646 = vmatpush.msra.mxu0 0.0
    %647 = vmatpush.msra.mxu0 0.0
    %648 = vmatpush.msra.mxu0 0.0
    %649 = vmatpush.msra.mxu0 0.0
    %650 = vmatpush.msra.mxu0 0.0
    %651 = vmatpush.msra.mxu0 0.0
    %652 = vmatpush.msra.mxu0 0.0
    %653 = vmatpush.msra.mxu0 0.0
    %654 = vmatpush.msra.mxu0 0.0
    %655 = vmatpush.msra.mxu0 0.0
    %656 = vmatpush.msra.mxu0 %v145
    %657 = vmatmul.f32.gmra.mxu0 %v639
    %v658 = vpop.f32.mrf.mxu0
    %v659 = vadd.f32 0.0, %v658
    %660 = vdwg.mxu0
    %v661 = vadd.f32 %v635, %v659
    %v662 = vxor.u32 %v661, 2147483648
    %v663 = vmul.f32 %v662, 1.442695
    %v664 = vpow.pop %v663
    %v665 = vadd.f32 %v664, 1.0
    %v666 = vrcp.pop %v665
    %v667 = vmul.f32 %v665, %v666
    %v668 = vsub.f32 1.0, %v667
    %v669 = vmul.f32 %v666, %v668
    %v670 = vadd.f32 %v666, %v669
    %vm671 = vweird.f32 %v665
    %vm672 = vweird.f32 %v666
    %vm673 = vmor %vm671, %vm672
    %v674 = vsel %vm673, %v666, %v670
    %v675 = vand.u32 2147483647, %v665
    %vm676 = vcmp.eq.f32.partialorder %v675, 8.507059e+37
    %v677 = vand.u32 %v665, 2147483648
    %v678 = vor.u32 1.1754944e-38, %v677
    %v679 = vsel %vm676, %v678, %v674
    %v680 = vmul.f32 1.0, %v679
    %v681 = vtanh.pop %v661
    %v682 = vmul.f32 %v680, %v622
    %684 = vrot.lane.b32.xlu0 %v681, 113
    %v685 = vpop.permute.xlu0 %684
    %v687 = vmul.f32 %v680, %v685
    %689 = vrot.lane.b32.xlu0 %v687, 5
    %v690 = vpop.permute.xlu0 %689
    %v692 = vadd.f32 %v682, %v690
    %v693 = vtanh.pop %v692
    %695 = vrot.lane.b32.xlu0 %v693, 5
    %v696 = vpop.permute.xlu0 %695
    %v698 = vmul.f32 %v680, %v696
    %v699 = vmax.f32 %v698, 0.0
    %701 = vrot.lane.b32.xlu0 %v699, 118
    %v702 = vpop.permute.xlu0 %701
    %704 = vst.msk [vmem:[#allocation3 + $0x10] sm:$0x3] %vm134, %v702
    %v705 = vld [vmem:[#allocation2 + $0x12] sm:$0x3]
    %707 = vrot.lane.b32.xlu0 %v698, 118
    %v708 = vpop.permute.xlu0 %707
    %v709 = vsel %vm140, %v708, 0
    %711 = vmatpush.msra.mxu0 0.0
    %712 = vmatpush.msra.mxu0 0.0
    %713 = vmatpush.msra.mxu0 0.0
    %714 = vmatpush.msra.mxu0 0.0
    %715 = vmatpush.msra.mxu0 0.0
    %716 = vmatpush.msra.mxu0 0.0
    %717 = vmatpush.msra.mxu0 0.0
    %718 = vmatpush.msra.mxu0 0.0
    %719 = vmatpush.msra.mxu0 0.0
    %720 = vmatpush.msra.mxu0 0.0
    %721 = vmatpush.msra.mxu0 0.0
    %722 = vmatpush.msra.mxu0 0.0
    %723 = vmatpush.msra.mxu0 0.0
    %724 = vmatpush.msra.mxu0 0.0
    %725 = vmatpush.msra.mxu0 0.0
    %726 = vmatpush.msra.mxu0 %v145
    %727 = vmatmul.f32.gmra.mxu0 %v709
    %v728 = vpop.f32.mrf.mxu0
    %v729 = vadd.f32 0.0, %v728
    %730 = vdwg.mxu0
    %v731 = vadd.f32 %v705, %v729
    %v732 = vxor.u32 %v731, 2147483648
    %v733 = vmul.f32 %v732, 1.442695
    %v734 = vpow.pop %v733
    %v735 = vadd.f32 %v734, 1.0
    %v736 = vrcp.pop %v735
    %v737 = vmul.f32 %v735, %v736
    %v738 = vsub.f32 1.0, %v737
    %v739 = vmul.f32 %v736, %v738
    %v740 = vadd.f32 %v736, %v739
    %vm741 = vweird.f32 %v735
    %vm742 = vweird.f32 %v736
    %vm743 = vmor %vm741, %vm742
    %v744 = vsel %vm743, %v736, %v740
    %v745 = vand.u32 2147483647, %v735
    %vm746 = vcmp.eq.f32.partialorder %v745, 8.507059e+37
    %v747 = vand.u32 %v735, 2147483648
    %v748 = vor.u32 1.1754944e-38, %v747
    %v749 = vsel %vm746, %v748, %v744
    %v750 = vmul.f32 1.0, %v749
    %v751 = vtanh.pop %v731
    %v752 = vmul.f32 %v750, %v692
    %754 = vrot.lane.b32.xlu0 %v751, 113
    %v755 = vpop.permute.xlu0 %754
    %v757 = vmul.f32 %v750, %v755
    %759 = vrot.lane.b32.xlu0 %v757, 5
    %v760 = vpop.permute.xlu0 %759
    %v762 = vadd.f32 %v752, %v760
    %v763 = vtanh.pop %v762
    %765 = vrot.lane.b32.xlu0 %v763, 5
    %v766 = vpop.permute.xlu0 %765
    %v768 = vmul.f32 %v750, %v766
    %v769 = vmax.f32 %v768, 0.0
    %771 = vrot.lane.b32.xlu0 %v769, 118
    %v772 = vpop.permute.xlu0 %771
    %774 = vst.msk [vmem:[#allocation3 + $0x12] sm:$0x3] %vm134, %v772
    %v775 = vld [vmem:[#allocation2 + $0x14] sm:$0x3]
    %777 = vrot.lane.b32.xlu0 %v768, 118
    %v778 = vpop.permute.xlu0 %777
    %v779 = vsel %vm140, %v778, 0
    %781 = vmatpush.msra.mxu0 0.0
    %782 = vmatpush.msra.mxu0 0.0
    %783 = vmatpush.msra.mxu0 0.0
    %784 = vmatpush.msra.mxu0 0.0
    %785 = vmatpush.msra.mxu0 0.0
    %786 = vmatpush.msra.mxu0 0.0
    %787 = vmatpush.msra.mxu0 0.0
    %788 = vmatpush.msra.mxu0 0.0
    %789 = vmatpush.msra.mxu0 0.0
    %790 = vmatpush.msra.mxu0 0.0
    %791 = vmatpush.msra.mxu0 0.0
    %792 = vmatpush.msra.mxu0 0.0
    %793 = vmatpush.msra.mxu0 0.0
    %794 = vmatpush.msra.mxu0 0.0
    %795 = vmatpush.msra.mxu0 0.0
    %796 = vmatpush.msra.mxu0 %v145
    %797 = vmatmul.f32.gmra.mxu0 %v779
    %v798 = vpop.f32.mrf.mxu0
    %v799 = vadd.f32 0.0, %v798
    %800 = vdwg.mxu0
    %v801 = vadd.f32 %v775, %v799
    %v802 = vxor.u32 %v801, 2147483648
    %v803 = vmul.f32 %v802, 1.442695
    %v804 = vpow.pop %v803
    %v805 = vadd.f32 %v804, 1.0
    %v806 = vrcp.pop %v805
    %v807 = vmul.f32 %v805, %v806
    %v808 = vsub.f32 1.0, %v807
    %v809 = vmul.f32 %v806, %v808
    %v810 = vadd.f32 %v806, %v809
    %vm811 = vweird.f32 %v805
    %vm812 = vweird.f32 %v806
    %vm813 = vmor %vm811, %vm812
    %v814 = vsel %vm813, %v806, %v810
    %v815 = vand.u32 2147483647, %v805
    %vm816 = vcmp.eq.f32.partialorder %v815, 8.507059e+37
    %v817 = vand.u32 %v805, 2147483648
    %v818 = vor.u32 1.1754944e-38, %v817
    %v819 = vsel %vm816, %v818, %v814
    %v820 = vmul.f32 1.0, %v819
    %v821 = vtanh.pop %v801
    %v822 = vmul.f32 %v820, %v762
    %824 = vrot.lane.b32.xlu0 %v821, 113
    %v825 = vpop.permute.xlu0 %824
    %v827 = vmul.f32 %v820, %v825
    %829 = vrot.lane.b32.xlu0 %v827, 5
    %v830 = vpop.permute.xlu0 %829
    %v832 = vadd.f32 %v822, %v830
    %v833 = vtanh.pop %v832
    %835 = vrot.lane.b32.xlu0 %v833, 5
    %v836 = vpop.permute.xlu0 %835
    %v838 = vmul.f32 %v820, %v836
    %v839 = vmax.f32 %v838, 0.0
    %841 = vrot.lane.b32.xlu0 %v839, 118
    %v842 = vpop.permute.xlu0 %841
    %844 = vst.msk [vmem:[#allocation3 + $0x14] sm:$0x3] %vm134, %v842
    %v845 = vld [vmem:[#allocation2 + $0x16] sm:$0x3]
    %847 = vrot.lane.b32.xlu0 %v838, 118
    %v848 = vpop.permute.xlu0 %847
    %v849 = vsel %vm140, %v848, 0
    %851 = vmatpush.msra.mxu0 0.0
    %852 = vmatpush.msra.mxu0 0.0
    %853 = vmatpush.msra.mxu0 0.0
    %854 = vmatpush.msra.mxu0 0.0
    %855 = vmatpush.msra.mxu0 0.0
    %856 = vmatpush.msra.mxu0 0.0
    %857 = vmatpush.msra.mxu0 0.0
    %858 = vmatpush.msra.mxu0 0.0
    %859 = vmatpush.msra.mxu0 0.0
    %860 = vmatpush.msra.mxu0 0.0
    %861 = vmatpush.msra.mxu0 0.0
    %862 = vmatpush.msra.mxu0 0.0
    %863 = vmatpush.msra.mxu0 0.0
    %864 = vmatpush.msra.mxu0 0.0
    %865 = vmatpush.msra.mxu0 0.0
    %866 = vmatpush.msra.mxu0 %v145
    %867 = vmatmul.f32.gmra.mxu0 %v849
    %v868 = vpop.f32.mrf.mxu0
    %v869 = vadd.f32 0.0, %v868
    %870 = vdwg.mxu0
    %v871 = vadd.f32 %v845, %v869
    %v872 = vxor.u32 %v871, 2147483648
    %v873 = vmul.f32 %v872, 1.442695
    %v874 = vpow.pop %v873
    %v875 = vadd.f32 %v874, 1.0
    %v876 = vrcp.pop %v875
    %v877 = vmul.f32 %v875, %v876
    %v878 = vsub.f32 1.0, %v877
    %v879 = vmul.f32 %v876, %v878
    %v880 = vadd.f32 %v876, %v879
    %vm881 = vweird.f32 %v875
    %vm882 = vweird.f32 %v876
    %vm883 = vmor %vm881, %vm882
    %v884 = vsel %vm883, %v876, %v880
    %v885 = vand.u32 2147483647, %v875
    %vm886 = vcmp.eq.f32.partialorder %v885, 8.507059e+37
    %v887 = vand.u32 %v875, 2147483648
    %v888 = vor.u32 1.1754944e-38, %v887
    %v889 = vsel %vm886, %v888, %v884
    %v890 = vmul.f32 1.0, %v889
    %v891 = vtanh.pop %v871
    %v892 = vmul.f32 %v890, %v832
    %894 = vrot.lane.b32.xlu0 %v891, 113
    %v895 = vpop.permute.xlu0 %894
    %v897 = vmul.f32 %v890, %v895
    %899 = vrot.lane.b32.xlu0 %v897, 5
    %v900 = vpop.permute.xlu0 %899
    %v902 = vadd.f32 %v892, %v900
    %v903 = vtanh.pop %v902
    %905 = vrot.lane.b32.xlu0 %v903, 5
    %v906 = vpop.permute.xlu0 %905
    %v908 = vmul.f32 %v890, %v906
    %v909 = vmax.f32 %v908, 0.0
    %911 = vrot.lane.b32.xlu0 %v909, 118
    %v912 = vpop.permute.xlu0 %911
    %914 = vst.msk [vmem:[#allocation3 + $0x16] sm:$0x3] %vm134, %v912
    %v915 = vld [vmem:[#allocation2 + $0x18] sm:$0x3]
    %917 = vrot.lane.b32.xlu0 %v908, 118
    %v918 = vpop.permute.xlu0 %917
    %v919 = vsel %vm140, %v918, 0
    %921 = vmatpush.msra.mxu0 0.0
    %922 = vmatpush.msra.mxu0 0.0
    %923 = vmatpush.msra.mxu0 0.0
    %924 = vmatpush.msra.mxu0 0.0
    %925 = vmatpush.msra.mxu0 0.0
    %926 = vmatpush.msra.mxu0 0.0
    %927 = vmatpush.msra.mxu0 0.0
    %928 = vmatpush.msra.mxu0 0.0
    %929 = vmatpush.msra.mxu0 0.0
    %930 = vmatpush.msra.mxu0 0.0
    %931 = vmatpush.msra.mxu0 0.0
    %932 = vmatpush.msra.mxu0 0.0
    %933 = vmatpush.msra.mxu0 0.0
    %934 = vmatpush.msra.mxu0 0.0
    %935 = vmatpush.msra.mxu0 0.0
    %936 = vmatpush.msra.mxu0 %v145
    %937 = vmatmul.f32.gmra.mxu0 %v919
    %v938 = vpop.f32.mrf.mxu0
    %v939 = vadd.f32 0.0, %v938
    %940 = vdwg.mxu0
    %v941 = vadd.f32 %v915, %v939
    %v942 = vxor.u32 %v941, 2147483648
    %v943 = vmul.f32 %v942, 1.442695
    %v944 = vpow.pop %v943
    %v945 = vadd.f32 %v944, 1.0
    %v946 = vrcp.pop %v945
    %v947 = vmul.f32 %v945, %v946
    %v948 = vsub.f32 1.0, %v947
    %v949 = vmul.f32 %v946, %v948
    %v950 = vadd.f32 %v946, %v949
    %vm951 = vweird.f32 %v945
    %vm952 = vweird.f32 %v946
    %vm953 = vmor %vm951, %vm952
    %v954 = vsel %vm953, %v946, %v950
    %v955 = vand.u32 2147483647, %v945
    %vm956 = vcmp.eq.f32.partialorder %v955, 8.507059e+37
    %v957 = vand.u32 %v945, 2147483648
    %v958 = vor.u32 1.1754944e-38, %v957
    %v959 = vsel %vm956, %v958, %v954
    %v960 = vmul.f32 1.0, %v959
    %v961 = vtanh.pop %v941
    %v962 = vmul.f32 %v960, %v902
    %964 = vrot.lane.b32.xlu0 %v961, 113
    %v965 = vpop.permute.xlu0 %964
    %v967 = vmul.f32 %v960, %v965
    %969 = vrot.lane.b32.xlu0 %v967, 5
    %v970 = vpop.permute.xlu0 %969
    %v972 = vadd.f32 %v962, %v970
    %v973 = vtanh.pop %v972
    %975 = vrot.lane.b32.xlu0 %v973, 5
    %v976 = vpop.permute.xlu0 %975
    %v978 = vmul.f32 %v960, %v976
    %v979 = vmax.f32 %v978, 0.0
    %981 = vrot.lane.b32.xlu0 %v979, 118
    %v982 = vpop.permute.xlu0 %981
    %984 = vst.msk [vmem:[#allocation3 + $0x18] sm:$0x3] %vm134, %v982
    %v985 = vld [vmem:[#allocation2 + $0x1a] sm:$0x3]
    %987 = vrot.lane.b32.xlu0 %v978, 118
    %v988 = vpop.permute.xlu0 %987
    %v989 = vsel %vm140, %v988, 0
    %991 = vmatpush.msra.mxu0 0.0
    %992 = vmatpush.msra.mxu0 0.0
    %993 = vmatpush.msra.mxu0 0.0
    %994 = vmatpush.msra.mxu0 0.0
    %995 = vmatpush.msra.mxu0 0.0
    %996 = vmatpush.msra.mxu0 0.0
    %997 = vmatpush.msra.mxu0 0.0
    %998 = vmatpush.msra.mxu0 0.0
    %999 = vmatpush.msra.mxu0 0.0
    %1000 = vmatpush.msra.mxu0 0.0
    %1001 = vmatpush.msra.mxu0 0.0
    %1002 = vmatpush.msra.mxu0 0.0
    %1003 = vmatpush.msra.mxu0 0.0
    %1004 = vmatpush.msra.mxu0 0.0
    %1005 = vmatpush.msra.mxu0 0.0
    %1006 = vmatpush.msra.mxu0 %v145
    %1007 = vmatmul.f32.gmra.mxu0 %v989
    %v1008 = vpop.f32.mrf.mxu0
    %v1009 = vadd.f32 0.0, %v1008
    %1010 = vdwg.mxu0
    %v1011 = vadd.f32 %v985, %v1009
    %v1012 = vxor.u32 %v1011, 2147483648
    %v1013 = vmul.f32 %v1012, 1.442695
    %v1014 = vpow.pop %v1013
    %v1015 = vadd.f32 %v1014, 1.0
    %v1016 = vrcp.pop %v1015
    %v1017 = vmul.f32 %v1015, %v1016
    %v1018 = vsub.f32 1.0, %v1017
    %v1019 = vmul.f32 %v1016, %v1018
    %v1020 = vadd.f32 %v1016, %v1019
    %vm1021 = vweird.f32 %v1015
    %vm1022 = vweird.f32 %v1016
    %vm1023 = vmor %vm1021, %vm1022
    %v1024 = vsel %vm1023, %v1016, %v1020
    %v1025 = vand.u32 2147483647, %v1015
    %vm1026 = vcmp.eq.f32.partialorder %v1025, 8.507059e+37
    %v1027 = vand.u32 %v1015, 2147483648
    %v1028 = vor.u32 1.1754944e-38, %v1027
    %v1029 = vsel %vm1026, %v1028, %v1024
    %v1030 = vmul.f32 1.0, %v1029
    %v1031 = vtanh.pop %v1011
    %v1032 = vmul.f32 %v1030, %v972
    %1034 = vrot.lane.b32.xlu0 %v1031, 113
    %v1035 = vpop.permute.xlu0 %1034
    %v1037 = vmul.f32 %v1030, %v1035
    %1039 = vrot.lane.b32.xlu0 %v1037, 5
    %v1040 = vpop.permute.xlu0 %1039
    %v1042 = vadd.f32 %v1032, %v1040
    %v1043 = vtanh.pop %v1042
    %1045 = vrot.lane.b32.xlu0 %v1043, 5
    %v1046 = vpop.permute.xlu0 %1045
    %v1048 = vmul.f32 %v1030, %v1046
    %v1049 = vmax.f32 %v1048, 0.0
    %1051 = vrot.lane.b32.xlu0 %v1049, 118
    %v1052 = vpop.permute.xlu0 %1051
    %1054 = vst.msk [vmem:[#allocation3 + $0x1a] sm:$0x3] %vm134, %v1052
    %v1055 = vld [vmem:[#allocation2 + $0x1c] sm:$0x3]
    %1057 = vrot.lane.b32.xlu0 %v1048, 118
    %v1058 = vpop.permute.xlu0 %1057
    %v1059 = vsel %vm140, %v1058, 0
    %1061 = vmatpush.msra.mxu0 0.0
    %1062 = vmatpush.msra.mxu0 0.0
    %1063 = vmatpush.msra.mxu0 0.0
    %1064 = vmatpush.msra.mxu0 0.0
    %1065 = vmatpush.msra.mxu0 0.0
    %1066 = vmatpush.msra.mxu0 0.0
    %1067 = vmatpush.msra.mxu0 0.0
    %1068 = vmatpush.msra.mxu0 0.0
    %1069 = vmatpush.msra.mxu0 0.0
    %1070 = vmatpush.msra.mxu0 0.0
    %1071 = vmatpush.msra.mxu0 0.0
    %1072 = vmatpush.msra.mxu0 0.0
    %1073 = vmatpush.msra.mxu0 0.0
    %1074 = vmatpush.msra.mxu0 0.0
    %1075 = vmatpush.msra.mxu0 0.0
    %1076 = vmatpush.msra.mxu0 %v145
    %1077 = vmatmul.f32.gmra.mxu0 %v1059
    %v1078 = vpop.f32.mrf.mxu0
    %v1079 = vadd.f32 0.0, %v1078
    %1080 = vdwg.mxu0
    %v1081 = vadd.f32 %v1055, %v1079
    %v1082 = vxor.u32 %v1081, 2147483648
    %v1083 = vmul.f32 %v1082, 1.442695
    %v1084 = vpow.pop %v1083
    %v1085 = vadd.f32 %v1084, 1.0
    %v1086 = vrcp.pop %v1085
    %v1087 = vmul.f32 %v1085, %v1086
    %v1088 = vsub.f32 1.0, %v1087
    %v1089 = vmul.f32 %v1086, %v1088
    %v1090 = vadd.f32 %v1086, %v1089
    %vm1091 = vweird.f32 %v1085
    %vm1092 = vweird.f32 %v1086
    %vm1093 = vmor %vm1091, %vm1092
    %v1094 = vsel %vm1093, %v1086, %v1090
    %v1095 = vand.u32 2147483647, %v1085
    %vm1096 = vcmp.eq.f32.partialorder %v1095, 8.507059e+37
    %v1097 = vand.u32 %v1085, 2147483648
    %v1098 = vor.u32 1.1754944e-38, %v1097
    %v1099 = vsel %vm1096, %v1098, %v1094
    %v1100 = vmul.f32 1.0, %v1099
    %v1101 = vtanh.pop %v1081
    %v1102 = vmul.f32 %v1100, %v1042
    %1104 = vrot.lane.b32.xlu0 %v1101, 113
    %v1105 = vpop.permute.xlu0 %1104
    %v1107 = vmul.f32 %v1100, %v1105
    %1109 = vrot.lane.b32.xlu0 %v1107, 5
    %v1110 = vpop.permute.xlu0 %1109
    %v1112 = vadd.f32 %v1102, %v1110
    %v1113 = vtanh.pop %v1112
    %1115 = vrot.lane.b32.xlu0 %v1113, 5
    %v1116 = vpop.permute.xlu0 %1115
    %v1118 = vmul.f32 %v1100, %v1116
    %v1119 = vmax.f32 %v1118, 0.0
    %1121 = vrot.lane.b32.xlu0 %v1119, 118
    %v1122 = vpop.permute.xlu0 %1121
    %1124 = vst.msk [vmem:[#allocation3 + $0x1c] sm:$0x3] %vm134, %v1122
    %v1125 = vld [vmem:[#allocation2 + $0x1e] sm:$0x3]
    %1127 = vrot.lane.b32.xlu0 %v1118, 118
    %v1128 = vpop.permute.xlu0 %1127
    %v1129 = vsel %vm140, %v1128, 0
    %1131 = vmatpush.msra.mxu0 0.0
    %1132 = vmatpush.msra.mxu0 0.0
    %1133 = vmatpush.msra.mxu0 0.0
    %1134 = vmatpush.msra.mxu0 0.0
    %1135 = vmatpush.msra.mxu0 0.0
    %1136 = vmatpush.msra.mxu0 0.0
    %1137 = vmatpush.msra.mxu0 0.0
    %1138 = vmatpush.msra.mxu0 0.0
    %1139 = vmatpush.msra.mxu0 0.0
    %1140 = vmatpush.msra.mxu0 0.0
    %1141 = vmatpush.msra.mxu0 0.0
    %1142 = vmatpush.msra.mxu0 0.0
    %1143 = vmatpush.msra.mxu0 0.0
    %1144 = vmatpush.msra.mxu0 0.0
    %1145 = vmatpush.msra.mxu0 0.0
    %1146 = vmatpush.msra.mxu0 %v145
    %1147 = vmatmul.f32.gmra.mxu0 %v1129
    %v1148 = vpop.f32.mrf.mxu0
    %v1149 = vadd.f32 0.0, %v1148
    %1150 = vdwg.mxu0
    %v1151 = vadd.f32 %v1125, %v1149
    %v1152 = vxor.u32 %v1151, 2147483648
    %v1153 = vmul.f32 %v1152, 1.442695
    %v1154 = vpow.pop %v1153
    %v1155 = vadd.f32 %v1154, 1.0
    %v1156 = vrcp.pop %v1155
    %v1157 = vmul.f32 %v1155, %v1156
    %v1158 = vsub.f32 1.0, %v1157
    %v1159 = vmul.f32 %v1156, %v1158
    %v1160 = vadd.f32 %v1156, %v1159
    %vm1161 = vweird.f32 %v1155
    %vm1162 = vweird.f32 %v1156
    %vm1163 = vmor %vm1161, %vm1162
    %v1164 = vsel %vm1163, %v1156, %v1160
    %v1165 = vand.u32 2147483647, %v1155
    %vm1166 = vcmp.eq.f32.partialorder %v1165, 8.507059e+37
    %v1167 = vand.u32 %v1155, 2147483648
    %v1168 = vor.u32 1.1754944e-38, %v1167
    %v1169 = vsel %vm1166, %v1168, %v1164
    %v1170 = vmul.f32 1.0, %v1169
    %v1171 = vtanh.pop %v1151
    %v1172 = vmul.f32 %v1170, %v1112
    %1174 = vrot.lane.b32.xlu0 %v1171, 113
    %v1175 = vpop.permute.xlu0 %1174
    %v1177 = vmul.f32 %v1170, %v1175
    %1179 = vrot.lane.b32.xlu0 %v1177, 5
    %v1180 = vpop.permute.xlu0 %1179
    %v1182 = vadd.f32 %v1172, %v1180
    %v1183 = vtanh.pop %v1182
    %1185 = vrot.lane.b32.xlu0 %v1183, 5
    %v1186 = vpop.permute.xlu0 %1185
    %v1188 = vmul.f32 %v1170, %v1186
    %v1189 = vmax.f32 %v1188, 0.0
    %1191 = vrot.lane.b32.xlu0 %v1189, 118
    %v1192 = vpop.permute.xlu0 %1191
    %1194 = vst.msk [vmem:[#allocation3 + $0x1e] sm:$0x3] %vm134, %v1192
    %v1195 = vld [vmem:[#allocation3] sm:$0xff]
    %v1196 = vld [vmem:[#allocation3 + $0x8] sm:$0xff]
    %v1197 = vld [vmem:[#allocation3 + $0x10] sm:$0xff]
    %v1198 = vld [vmem:[#allocation3 + $0x18] sm:$0xf]
    %v1199 = vld [vmem:[#allocation3 + $0x2] sm:$0xff]
    %v1200 = vld [vmem:[#allocation3 + $0xa] sm:$0xff]
    %v1201 = vld [vmem:[#allocation3 + $0x12] sm:$0xff]
    %v1202 = vld [vmem:[#allocation3 + $0x1a] sm:$0xf]
    %v1203 = vld [vmem:[#allocation3 + $0x4] sm:$0xff]
    %v1204 = vld [vmem:[#allocation3 + $0xc] sm:$0xff]
    %v1205 = vld [vmem:[#allocation3 + $0x14] sm:$0xff]
    %v1206 = vld [vmem:[#allocation3 + $0x1c] sm:$0xf]
    %1211 = vrot.lane.b32.xlu0 %v1199, 5
    %v1212 = vpop.permute.xlu0 %1211
    %1213 = vrot.lane.b32.xlu0 %v1200, 5
    %v1214 = vpop.permute.xlu0 %1213
    %1215 = vrot.lane.b32.xlu0 %v1201, 5
    %v1216 = vpop.permute.xlu0 %1215
    %1217 = vrot.lane.b32.xlu0 %v1202, 5
    %v1218 = vpop.permute.xlu0 %1217
    %1227 = vrot.lane.b32.xlu0 %v1203, 10
    %v1228 = vpop.permute.xlu0 %1227
    %1229 = vrot.lane.b32.xlu0 %v1204, 10
    %v1230 = vpop.permute.xlu0 %1229
    %1231 = vrot.lane.b32.xlu0 %v1205, 10
    %v1232 = vpop.permute.xlu0 %1231
    %1233 = vrot.lane.b32.xlu0 %v1206, 10
    %v1234 = vpop.permute.xlu0 %1233
    %v1239 = vsel %vm140, %v1195, %v1212
    %v1240 = vsel %vm140, %v1196, %v1214
    %v1241 = vsel %vm140, %v1197, %v1216
    %v1242 = vsel %vm140, %v1198, %v1218
    %vm1243 = vcmask 80896
    %v1244 = vsel %vm1243, %v1239, %v1228
    %v1245 = vsel %vm1243, %v1240, %v1230
    %v1246 = vsel %vm1243, %v1241, %v1232
    %v1247 = vsel %vm1243, %v1242, %v1234
    %v1248 = vld [vmem:[%s4] sm:$0xff]
    %v1249 = vld [vmem:[%s4 + $0x8] sm:$0x7f]
    %v1250 = vld [vmem:[%s5] sm:$0x1]
    %v1252 = vperm.slane %v1250, 0
    %vm1254 = vcmask 121856
    %v1256 = vsel %vm1254, %v1244, 0
    %v1259 = vsel %vm1254, %v1245, 0
    %v1262 = vsel %vm1254, %v1246, 0
    %v1265 = vsel %vm1254, %v1247, 0
    %vm1267 = vcmask 1046528
    %v1269 = vsel %vm1267, %v1249, 0
    %1271 = vmatpush.msra.mxu0 0.0
    %1272 = vmatpush.msra.mxu0 0.0
    %1273 = vmatpush.msra.mxu0 0.0
    %1274 = vmatpush.msra.mxu0 0.0
    %1275 = vmatpush.msra.mxu0 0.0
    %1276 = vmatpush.msra.mxu0 0.0
    %1277 = vmatpush.msra.mxu0 0.0
    %1278 = vmatpush.msra.mxu0 0.0
    %1279 = vmatpush.msra.mxu0 0.0
    %1280 = vmatpush.msra.mxu0 0.0
    %1281 = vmatpush.msra.mxu0 0.0
    %1282 = vmatpush.msra.mxu0 0.0
    %1283 = vmatpush.msra.mxu0 0.0
    %1284 = vmatpush.msra.mxu0 0.0
    %1285 = vmatpush.msra.mxu0 %v1269
    %1286 = vmatpush.msra.mxu0 %v1248
    %1287 = vmatmul.f32.gmra.mxu0 %v1256
    %v1288 = vpop.f32.mrf.mxu0
    %v1289 = vadd.f32 %v1252, %v1288
    %1290 = vmatmul.f32.gmra.mxu0 %v1259
    %v1291 = vpop.f32.mrf.mxu0
    %v1292 = vadd.f32 %v1252, %v1291
    %1293 = vmatmul.f32.gmra.mxu0 %v1262
    %v1294 = vpop.f32.mrf.mxu0
    %v1295 = vadd.f32 %v1252, %v1294
    %1296 = vmatmul.f32.gmra.mxu0 %v1265
    %v1297 = vpop.f32.mrf.mxu0
    %v1298 = vadd.f32 %v1252, %v1297
    %1299 = vdwg.mxu0
    %v1300 = vmax.f32 %v1289, 0.0
    %v1301 = vmax.f32 %v1292, 0.0
    %v1302 = vmax.f32 %v1295, 0.0
    %v1303 = vmax.f32 %v1298, 0.0
    %v1305 = vrot.slane %v1300, 4
    %v1307 = vmax.f32 %v1300, %v1305
    %v1308 = vmax.f32 %v1307, %v1301
    %v1310 = vrot.slane %v1301, 4
    %v1312 = vmax.f32 %v1300, %v1310
    %v1313 = vmax.f32 %v1312, %v1301
    %v1314 = vmax.f32 %v1301, %v1310
    %v1315 = vmax.f32 %v1314, %v1302
    %v1317 = vrot.slane %v1302, 4
    %v1319 = vmax.f32 %v1301, %v1317
    %v1320 = vmax.f32 %v1319, %v1302
    %v1321 = vmax.f32 %v1302, %v1317
    %v1322 = vmax.f32 %v1321, %v1303
    %v1324 = vrot.slane %v1313, 2
    %v1327 = vrot.slane %v1315, 4
    %v1330 = vrot.slane %v1320, 6
    %vm1332 = vcmask 1041408
    %v1333 = vsel %vm1332, %v1308, %v1324
    %v1334 = vsel %vm58, %v1333, %v1327
    %vm1335 = vcmask 1045504
    %v1336 = vsel %vm1335, %v1334, %v1330
    %vm1337 = vcmask 408576
    %1338 = vst.msk [vmem:[#allocation4] sm:$0xff] %vm1337, %v1336
    %vm1339 = vcmask 402432
    %1340 = vst.msk [vmem:[#allocation4 + $0x8] sm:$0x3] %vm1339, %v1322
    // Predicated region
    $region26: #{tpu_custom_call.1} parent=1 // pred_check
      _
    $region27: #{tpu_custom_call.1} parent=1 // pred_check_branch
      %1342 = sbr.rel (0) target = $region29
    $region28: #{tpu_custom_call.1} parent=1 // pred_region
      %1344 = vsyncadd [#allocation5], 0
      %s1345 = sshll.u32 [#allocation4], 4
      %s1346 = int_to_ptr.vmem [resolvable:$true] %s1345
      %s1347 = sshll.u32 %s6, 4
      %s1348 = int_to_ptr.hbm [resolvable:$true] %s1347
      %1353 = dma.vmem_to_hbm [thread:$0]  %s1346, 256, %s1348, [#allocation5], 128, 128, 8
    $region29: #{tpu_custom_call.1} parent=1 // pred_fallthru
      _
    // Predicated region
    $region30: #{tpu_custom_call.1} parent=1 // pred_check
      _
    $region31: #{tpu_custom_call.1} parent=1 // pred_check_branch
      %1355 = sbr.rel (0) target = $region33
    $region32: #{tpu_custom_call.1} parent=1 // pred_region
      %1357 = dma.done [#allocation5], 256
    $region33: #{tpu_custom_call.1} parent=1 // pred_fallthru
      _
    %1358 = vsyncpa [#allocation5], 1

</llo_original>
